<compile_context>
chip_gen: v7x
topology: tpu7x:2x2x1
jax: 0.10.0
libtpu: 0.0.40
codegen_flags: <defaults>
</compile_context>

<pallas_src>
import jax
import jax.numpy as jnp
import numpy as np
from jax import lax
from jax.experimental import pallas as pl
from jax.experimental.pallas import tpu as pltpu


# ---------------------------------------------------------------------------
# Fused kernel: wavefront(LSTM L0 || L1) -> fc -> softmax -> mask -> renorm
# ---------------------------------------------------------------------------
def _make_fused_kernel(S, B, A, H, D):
    Bt = B * A  # folded batch, asset-major: row a*B + b holds sample (b, asset a)

    def kernel(x_ref, wih0w_ref, bw_ref, wcomb_ref, fcw_ref, fcb_ref, mask_ref,
               out_ref):
        # ---- hoisted layer-0 input projection (one big MXU dot, off the chain).
        # Columns follow the interleaved gate layout [i0,i1,f0,f1,g0,g1,o0,o1];
        # the layer-1 columns of W_ih0_wide are zero, so they carry only the
        # constant fused bias b1 from b_wide.  x has S+1 timesteps (last zeros).
        g_add = jnp.dot(x_ref[...], wih0w_ref[...],
                        preferred_element_type=jnp.float32) + bw_ref[...]
        # Bt is one sublane tile here, so the static row-block slices below are
        # single-tile reads (see scaling notes for the non-aligned case).

        wcomb = wcomb_ref[...]                                    # (2H, 8H)
        lane = lax.broadcasted_iota(jnp.int32, (Bt, 2 * H), 1)

        # Wavefront-skewed state: hh = [h0_t | h1_{t-1}], cc = [c0_t | c1_{t-1}].
        hh = jnp.zeros((Bt, 2 * H), jnp.float32)
        cc = jnp.zeros((Bt, 2 * H), jnp.float32)

        # Static unroll: S is a small compile-time constant.
        for step in range(S + 1):
            g = g_add[step * Bt:(step + 1) * Bt, :]               # (Bt, 8H)
            if step > 0:
                # ONE combined (Bt,2H)x(2H,8H) dot per wavefront step:
                #   layer-0 cols: h0_{step-1} @ W_hh0
                #   layer-1 cols: h0_{step-1} @ W_ih1 + h1_{step-2} @ W_hh1
                g = g + jnp.dot(hh, wcomb, preferred_element_type=jnp.float32)
            # Joint gate math over the full 8H block; its output IS the next
            # skewed state [h0_step | h1_{step-1}] -- no concat needed.
            sig = jax.nn.sigmoid(g)
            th = jnp.tanh(g)
            i_g = sig[:, 0 * H:2 * H]
            f_g = sig[:, 2 * H:4 * H]
            g_g = th[:, 4 * H:6 * H]
            o_g = sig[:, 6 * H:8 * H]
            cc = f_g * cc + i_g * g_g
            hh = o_g * jnp.tanh(cc)
            if step == 0:
                # Priming: layer-1 state must start at zero (its half of the
                # step-0 gate math is fed only by b1).  Cheap VPU lane select.
                hh = jnp.where(lane < H, hh, 0.0)
                cc = jnp.where(lane < H, cc, 0.0)

        # After step S (the padded layer-0 half is unused, finite garbage):
        h_fin = hh[:, H:2 * H]                                    # (Bt, H) = h1_{S-1}

        # ---- head: fc as independent per-asset dots (tree-summed), softmax,
        #      mask, renorm.  Reproduces torch.cat(outputs, dim=1) @ fc.W^T. ----
        parts = [
            jnp.dot(h_fin[a * B:(a + 1) * B, :], fcw_ref[a * H:(a + 1) * H, :],
                    preferred_element_type=jnp.float32)
            for a in range(A)
        ]
        while len(parts) > 1:                                     # pairwise tree sum
            nxt = [parts[i] + parts[i + 1] for i in range(0, len(parts) - 1, 2)]
            if len(parts) % 2:
                nxt.append(parts[-1])
            parts = nxt
        logits = parts[0] + fcb_ref[...]                          # (B, A)

        m = jnp.max(logits, axis=1, keepdims=True)
        e = jnp.exp(logits - m)
        p = e * pl.reciprocal(jnp.sum(e, axis=1, keepdims=True), approx=False)
        w = p * mask_ref[...]
        s = jnp.sum(w, axis=1, keepdims=True) + 1e-8
        out_ref[...] = w * pl.reciprocal(s, approx=False)

    return kernel


def _fused_forward(x_pad, wih0_wide, b_wide, w_comb, fcw_t, fcb, mask,
                   *, S, B, A, H, D):
    Bt = B * A
    kernel = _make_fused_kernel(S, B, A, H, D)
    return pl.pallas_call(
        kernel,
        out_shape=jax.ShapeDtypeStruct((B, A), jnp.float32),
        in_specs=[
            pl.BlockSpec(((S + 1) * Bt, D), lambda: (0, 0)),  # x, time-major + pad step
            pl.BlockSpec((D, 8 * H), lambda: (0, 0)),         # W_ih0 wide (interleaved cols)
            pl.BlockSpec((1, 8 * H), lambda: (0, 0)),         # fused biases (interleaved)
            pl.BlockSpec((2 * H, 8 * H), lambda: (0, 0)),     # [[Whh0, Wih1],[0, Whh1]]
            pl.BlockSpec((A * H, A), lambda: (0, 0)),         # fc weight (transposed)
            pl.BlockSpec((1, A), lambda: (0, 0)),             # fc bias
            pl.BlockSpec((B, A), lambda: (0, 0)),             # mask
        ],
        out_specs=pl.BlockSpec((B, A), lambda: (0, 0)),
        # No scratch: the layer-0 hidden sequence is never materialized.
        compiler_params=pltpu.CompilerParams(vmem_limit_bytes=32 * 1024 * 1024),
    )(x_pad, wih0_wide, b_wide, w_comb, fcw_t, fcb, mask)


# ---------------------------------------------------------------------------
# Full forward (layout plumbing in plain JAX, all compute in one Pallas call)
# ---------------------------------------------------------------------------
@jax.jit
def portfolio_lstm_forward(x, mask, params):
    # x: (B, A, S, D), mask: (B, A)
    B, A, S, D = x.shape
    assert len(params["lstm"]) == 2, "wavefront kernel is specialized to num_layers=2"
    (wih0_t, whh0_t, b0), (wih1_t, whh1_t, b1) = params["lstm"]
    H = whh0_t.shape[0]
    Bt = B * A

    # Asset-major fold of the shared StockLSTM: row a*B + b <- x[b, a]; then
    # time-major flatten + one zero pad timestep (uniform wavefront body).
    xa = jnp.transpose(x, (1, 0, 2, 3)).reshape(Bt, S, D)
    x_flat = jnp.transpose(xa, (1, 0, 2)).reshape(S * Bt, D).astype(jnp.float32)
    x_pad = jnp.concatenate([x_flat, jnp.zeros((Bt, D), jnp.float32)], axis=0)

    def interleave(w0, w1):
        # [i,f,g,o] column blocks of the two layers -> [i0,i1,f0,f1,g0,g1,o0,o1].
        cols = []
        for gi in range(4):
            cols.append(w0[:, gi * H:(gi + 1) * H])
            cols.append(w1[:, gi * H:(gi + 1) * H])
        return jnp.concatenate(cols, axis=1)

    # Plain-JAX layout plumbing (tiny, fused under jit): wide layer-0 input
    # projection, interleaved fused biases, and the combined recurrence weight
    # [[W_hh0, W_ih1], [0, W_hh1]] driving one 256-wide dot per wavefront step.
    wih0_wide = interleave(wih0_t, jnp.zeros_like(wih0_t))           # (D, 8H)
    b_wide = interleave(b0, b1)                                      # (1, 8H)
    w_comb = jnp.concatenate(
        [interleave(whh0_t, wih1_t),                                 # rows for h0
         interleave(jnp.zeros_like(whh0_t), whh1_t)], axis=0)        # rows for h1

    return _fused_forward(x_pad, wih0_wide, b_wide, w_comb,
                          params["fc_w_t"], params["fc_b"][None, :],
                          mask.astype(jnp.float32),
                          S=S, B=B, A=A, H=H, D=D)


# ---------------------------------------------------------------------------
# Deterministic parameter init (PyTorch-style uniform(-1/sqrt(H), 1/sqrt(H)))
# ---------------------------------------------------------------------------
def init_params(key, input_dim, hidden_dim, num_layers, num_assets):
    params = {"lstm": []}
    k = 1.0 / np.sqrt(hidden_dim)
    keys = jax.random.split(key, 4 * num_layers + 2)
    for l in range(num_layers):
        din = input_dim if l == 0 else hidden_dim
        wih = jax.random.uniform(keys[4 * l + 0], (4 * hidden_dim, din),
                                 minval=-k, maxval=k, dtype=jnp.float32)
        whh = jax.random.uniform(keys[4 * l + 1], (4 * hidden_dim, hidden_dim),
                                 minval=-k, maxval=k, dtype=jnp.float32)
        bih = jax.random.uniform(keys[4 * l + 2], (4 * hidden_dim,),
                                 minval=-k, maxval=k, dtype=jnp.float32)
        bhh = jax.random.uniform(keys[4 * l + 3], (4 * hidden_dim,),
                                 minval=-k, maxval=k, dtype=jnp.float32)
        # Pre-transpose + fuse biases for the kernel.
        params["lstm"].append((wih.T, whh.T, (bih + bhh)[None, :]))
    kf = 1.0 / np.sqrt(hidden_dim * num_assets)
    fc_w = jax.random.uniform(keys[-2], (num_assets, hidden_dim * num_assets),
                              minval=-kf, maxval=kf, dtype=jnp.float32)
    fc_b = jax.random.uniform(keys[-1], (num_assets,),
                              minval=-kf, maxval=kf, dtype=jnp.float32)
    params["fc_w_t"] = fc_w.T
    params["fc_b"] = fc_b
    return params


# ---------------------------------------------------------------------------
# Pure-JAX reference (for verification)
# ---------------------------------------------------------------------------
def reference_forward(x, mask, params):
    B, A, S, D = x.shape
    seq = jnp.transpose(x.reshape(B * A, S, D), (1, 0, 2)).astype(jnp.float32)
    for (wih_t, whh_t, bias) in params["lstm"]:
        H = whh_t.shape[0]

        def step(carry, xt):
            h, c = carry
            gates = xt @ wih_t + h @ whh_t + bias
            i = jax.nn.sigmoid(gates[:, :H])
            f = jax.nn.sigmoid(gates[:, H:2 * H])
            g = jnp.tanh(gates[:, 2 * H:3 * H])
            o = jax.nn.sigmoid(gates[:, 3 * H:])
            c = f * c + i * g
            h = o * jnp.tanh(c)
            return (h, c), h

        init = (jnp.zeros((B * A, H), jnp.float32), jnp.zeros((B * A, H), jnp.float32))
        _, seq = lax.scan(step, init, seq)
    combined = seq[-1].reshape(B, A * H)
    logits = combined @ params["fc_w_t"] + params["fc_b"]
    p = jax.nn.softmax(logits, axis=1)
    w = p * mask
    return w / (jnp.sum(w, axis=1, keepdims=True) + 1e-8)


if __name__ == "__main__":
    # Small, module-consistent shapes.
    batch, num_assets, seq_len, input_dim = 2, 4, 8, 8
    hidden_dim, num_layers, dropout = 32, 2, 0.2   # dropout is a no-op in inference

    key = jax.random.PRNGKey(0)
    kx, km, kp = jax.random.split(key, 3)
    x = jax.random.normal(kx, (batch, num_assets, seq_len, input_dim), dtype=jnp.float32)
    mask = (jax.random.uniform(km, (batch, num_assets)) > 0.3).astype(jnp.float32)

    params = init_params(kp, input_dim, hidden_dim, num_layers, num_assets)

    out = portfolio_lstm_forward(x, mask, params)
    out = jax.block_until_ready(out)

    ref = jax.block_until_ready(reference_forward(x, mask, params))
    np.testing.assert_allclose(np.asarray(out), np.asarray(ref), rtol=1e-5, atol=1e-5)

    print("KERNEL_OK")
</pallas_src>

<mosaic_0001>
module attributes {stable_mosaic.version = 11 : i64} {
  func.func @kernel(%arg0: memref<72x8xf32, #tpu.memory_space<vmem>>, %arg1: memref<8x256xf32, #tpu.memory_space<vmem>>, %arg2: memref<1x256xf32, #tpu.memory_space<vmem>>, %arg3: memref<64x256xf32, #tpu.memory_space<vmem>>, %arg4: memref<128x4xf32, #tpu.memory_space<vmem>>, %arg5: memref<1x4xf32, #tpu.memory_space<vmem>>, %arg6: memref<2x4xf32, #tpu.memory_space<vmem>>, %arg7: memref<2x4xf32, #tpu.memory_space<vmem>>) attributes {dimension_semantics = [], scalar_prefetch = 0 : i64, scratch_operands = 0 : i64, tpu.core_type = #tpu.core_type<tc>} {
    %c0 = arith.constant 0 : index
    %c0_0 = arith.constant 0 : index
    %0 = vector.load %arg0[%c0, %c0_0] : memref<72x8xf32, #tpu.memory_space<vmem>>, vector<72x8xf32>
    %c0_1 = arith.constant 0 : index
    %c0_2 = arith.constant 0 : index
    %1 = vector.load %arg1[%c0_1, %c0_2] : memref<8x256xf32, #tpu.memory_space<vmem>>, vector<8x256xf32>
    %cst = arith.constant dense<0.000000e+00> : vector<72x256xf32>
    %2 = tpu.matmul %0, %1, %cst {dimension_numbers = #tpu.dot_dimension_numbers<[1], [0], [0], [1], [0, 0, 1, 1], [], []>} : vector<72x8xf32>, vector<8x256xf32>, vector<72x256xf32> -> vector<72x256xf32>
    %c0_3 = arith.constant 0 : index
    %c0_4 = arith.constant 0 : index
    %3 = vector.load %arg2[%c0_3, %c0_4] : memref<1x256xf32, #tpu.memory_space<vmem>>, vector<1x256xf32>
    %4 = vector.broadcast %3 : vector<1x256xf32> to vector<72x256xf32>
    %5 = arith.addf %2, %4 : vector<72x256xf32>
    %c0_5 = arith.constant 0 : index
    %c0_6 = arith.constant 0 : index
    %6 = vector.load %arg3[%c0_5, %c0_6] : memref<64x256xf32, #tpu.memory_space<vmem>>, vector<64x256xf32>
    %7 = tpu.iota {dimensions = array<i32: 1>} : vector<8x64xi32>
    %cst_7 = arith.constant 0.000000e+00 : f32
    %8 = vector.broadcast %cst_7 : f32 to vector<8x64xf32>
    %9 = vector.extract_strided_slice %5 {offsets = [0, 0], sizes = [8, 256], strides = [1, 1]} : vector<72x256xf32> to vector<8x256xf32>
    %10 = arith.negf %9 : vector<8x256xf32>
    %11 = math.exp %10 : vector<8x256xf32>
    %cst_8 = arith.constant 1.000000e+00 : f32
    %12 = vector.broadcast %cst_8 : f32 to vector<8x256xf32>
    %13 = arith.addf %12, %11 : vector<8x256xf32>
    %14 = arith.divf %12, %13 : vector<8x256xf32>
    %15 = math.tanh %9 : vector<8x256xf32>
    %16 = vector.extract_strided_slice %14 {offsets = [0, 0], sizes = [8, 64], strides = [1, 1]} : vector<8x256xf32> to vector<8x64xf32>
    %17 = vector.extract_strided_slice %14 {offsets = [0, 64], sizes = [8, 64], strides = [1, 1]} : vector<8x256xf32> to vector<8x64xf32>
    %18 = vector.extract_strided_slice %15 {offsets = [0, 128], sizes = [8, 64], strides = [1, 1]} : vector<8x256xf32> to vector<8x64xf32>
    %19 = vector.extract_strided_slice %14 {offsets = [0, 192], sizes = [8, 64], strides = [1, 1]} : vector<8x256xf32> to vector<8x64xf32>
    %20 = arith.mulf %17, %8 : vector<8x64xf32>
    %21 = arith.mulf %16, %18 : vector<8x64xf32>
    %22 = arith.addf %20, %21 : vector<8x64xf32>
    %23 = math.tanh %22 : vector<8x64xf32>
    %24 = arith.mulf %19, %23 : vector<8x64xf32>
    %c32_i32 = arith.constant 32 : i32
    %25 = vector.broadcast %c32_i32 : i32 to vector<8x64xi32>
    %26 = arith.cmpi slt, %7, %25 : vector<8x64xi32>
    %cst_9 = arith.constant 0.000000e+00 : f32
    %27 = vector.broadcast %cst_9 : f32 to vector<8x64xf32>
    %28 = arith.select %26, %24, %27 : vector<8x64xi1>, vector<8x64xf32>
    %c32_i32_10 = arith.constant 32 : i32
    %29 = vector.broadcast %c32_i32_10 : i32 to vector<8x64xi32>
    %30 = arith.cmpi slt, %7, %29 : vector<8x64xi32>
    %cst_11 = arith.constant 0.000000e+00 : f32
    %31 = vector.broadcast %cst_11 : f32 to vector<8x64xf32>
    %32 = arith.select %30, %22, %31 : vector<8x64xi1>, vector<8x64xf32>
    %33 = vector.extract_strided_slice %5 {offsets = [8, 0], sizes = [8, 256], strides = [1, 1]} : vector<72x256xf32> to vector<8x256xf32>
    %cst_12 = arith.constant dense<0.000000e+00> : vector<8x256xf32>
    %34 = tpu.matmul %28, %6, %cst_12 {dimension_numbers = #tpu.dot_dimension_numbers<[1], [0], [0], [1], [0, 0, 1, 1], [], []>} : vector<8x64xf32>, vector<64x256xf32>, vector<8x256xf32> -> vector<8x256xf32>
    %35 = arith.addf %33, %34 : vector<8x256xf32>
    %36 = arith.negf %35 : vector<8x256xf32>
    %37 = math.exp %36 : vector<8x256xf32>
    %cst_13 = arith.constant 1.000000e+00 : f32
    %38 = vector.broadcast %cst_13 : f32 to vector<8x256xf32>
    %39 = arith.addf %38, %37 : vector<8x256xf32>
    %40 = arith.divf %38, %39 : vector<8x256xf32>
    %41 = math.tanh %35 : vector<8x256xf32>
    %42 = vector.extract_strided_slice %40 {offsets = [0, 0], sizes = [8, 64], strides = [1, 1]} : vector<8x256xf32> to vector<8x64xf32>
    %43 = vector.extract_strided_slice %40 {offsets = [0, 64], sizes = [8, 64], strides = [1, 1]} : vector<8x256xf32> to vector<8x64xf32>
    %44 = vector.extract_strided_slice %41 {offsets = [0, 128], sizes = [8, 64], strides = [1, 1]} : vector<8x256xf32> to vector<8x64xf32>
    %45 = vector.extract_strided_slice %40 {offsets = [0, 192], sizes = [8, 64], strides = [1, 1]} : vector<8x256xf32> to vector<8x64xf32>
    %46 = arith.mulf %43, %32 : vector<8x64xf32>
    %47 = arith.mulf %42, %44 : vector<8x64xf32>
    %48 = arith.addf %46, %47 : vector<8x64xf32>
    %49 = math.tanh %48 : vector<8x64xf32>
    %50 = arith.mulf %45, %49 : vector<8x64xf32>
    %51 = vector.extract_strided_slice %5 {offsets = [16, 0], sizes = [8, 256], strides = [1, 1]} : vector<72x256xf32> to vector<8x256xf32>
    %cst_14 = arith.constant dense<0.000000e+00> : vector<8x256xf32>
    %52 = tpu.matmul %50, %6, %cst_14 {dimension_numbers = #tpu.dot_dimension_numbers<[1], [0], [0], [1], [0, 0, 1, 1], [], []>} : vector<8x64xf32>, vector<64x256xf32>, vector<8x256xf32> -> vector<8x256xf32>
    %53 = arith.addf %51, %52 : vector<8x256xf32>
    %54 = arith.negf %53 : vector<8x256xf32>
    %55 = math.exp %54 : vector<8x256xf32>
    %cst_15 = arith.constant 1.000000e+00 : f32
    %56 = vector.broadcast %cst_15 : f32 to vector<8x256xf32>
    %57 = arith.addf %56, %55 : vector<8x256xf32>
    %58 = arith.divf %56, %57 : vector<8x256xf32>
    %59 = math.tanh %53 : vector<8x256xf32>
    %60 = vector.extract_strided_slice %58 {offsets = [0, 0], sizes = [8, 64], strides = [1, 1]} : vector<8x256xf32> to vector<8x64xf32>
    %61 = vector.extract_strided_slice %58 {offsets = [0, 64], sizes = [8, 64], strides = [1, 1]} : vector<8x256xf32> to vector<8x64xf32>
    %62 = vector.extract_strided_slice %59 {offsets = [0, 128], sizes = [8, 64], strides = [1, 1]} : vector<8x256xf32> to vector<8x64xf32>
    %63 = vector.extract_strided_slice %58 {offsets = [0, 192], sizes = [8, 64], strides = [1, 1]} : vector<8x256xf32> to vector<8x64xf32>
    %64 = arith.mulf %61, %48 : vector<8x64xf32>
    %65 = arith.mulf %60, %62 : vector<8x64xf32>
    %66 = arith.addf %64, %65 : vector<8x64xf32>
    %67 = math.tanh %66 : vector<8x64xf32>
    %68 = arith.mulf %63, %67 : vector<8x64xf32>
    %69 = vector.extract_strided_slice %5 {offsets = [24, 0], sizes = [8, 256], strides = [1, 1]} : vector<72x256xf32> to vector<8x256xf32>
    %cst_16 = arith.constant dense<0.000000e+00> : vector<8x256xf32>
    %70 = tpu.matmul %68, %6, %cst_16 {dimension_numbers = #tpu.dot_dimension_numbers<[1], [0], [0], [1], [0, 0, 1, 1], [], []>} : vector<8x64xf32>, vector<64x256xf32>, vector<8x256xf32> -> vector<8x256xf32>
    %71 = arith.addf %69, %70 : vector<8x256xf32>
    %72 = arith.negf %71 : vector<8x256xf32>
    %73 = math.exp %72 : vector<8x256xf32>
    %cst_17 = arith.constant 1.000000e+00 : f32
    %74 = vector.broadcast %cst_17 : f32 to vector<8x256xf32>
    %75 = arith.addf %74, %73 : vector<8x256xf32>
    %76 = arith.divf %74, %75 : vector<8x256xf32>
    %77 = math.tanh %71 : vector<8x256xf32>
    %78 = vector.extract_strided_slice %76 {offsets = [0, 0], sizes = [8, 64], strides = [1, 1]} : vector<8x256xf32> to vector<8x64xf32>
    %79 = vector.extract_strided_slice %76 {offsets = [0, 64], sizes = [8, 64], strides = [1, 1]} : vector<8x256xf32> to vector<8x64xf32>
    %80 = vector.extract_strided_slice %77 {offsets = [0, 128], sizes = [8, 64], strides = [1, 1]} : vector<8x256xf32> to vector<8x64xf32>
    %81 = vector.extract_strided_slice %76 {offsets = [0, 192], sizes = [8, 64], strides = [1, 1]} : vector<8x256xf32> to vector<8x64xf32>
    %82 = arith.mulf %79, %66 : vector<8x64xf32>
    %83 = arith.mulf %78, %80 : vector<8x64xf32>
    %84 = arith.addf %82, %83 : vector<8x64xf32>
    %85 = math.tanh %84 : vector<8x64xf32>
    %86 = arith.mulf %81, %85 : vector<8x64xf32>
    %87 = vector.extract_strided_slice %5 {offsets = [32, 0], sizes = [8, 256], strides = [1, 1]} : vector<72x256xf32> to vector<8x256xf32>
    %cst_18 = arith.constant dense<0.000000e+00> : vector<8x256xf32>
    %88 = tpu.matmul %86, %6, %cst_18 {dimension_numbers = #tpu.dot_dimension_numbers<[1], [0], [0], [1], [0, 0, 1, 1], [], []>} : vector<8x64xf32>, vector<64x256xf32>, vector<8x256xf32> -> vector<8x256xf32>
    %89 = arith.addf %87, %88 : vector<8x256xf32>
    %90 = arith.negf %89 : vector<8x256xf32>
    %91 = math.exp %90 : vector<8x256xf32>
    %cst_19 = arith.constant 1.000000e+00 : f32
    %92 = vector.broadcast %cst_19 : f32 to vector<8x256xf32>
    %93 = arith.addf %92, %91 : vector<8x256xf32>
    %94 = arith.divf %92, %93 : vector<8x256xf32>
    %95 = math.tanh %89 : vector<8x256xf32>
    %96 = vector.extract_strided_slice %94 {offsets = [0, 0], sizes = [8, 64], strides = [1, 1]} : vector<8x256xf32> to vector<8x64xf32>
    %97 = vector.extract_strided_slice %94 {offsets = [0, 64], sizes = [8, 64], strides = [1, 1]} : vector<8x256xf32> to vector<8x64xf32>
    %98 = vector.extract_strided_slice %95 {offsets = [0, 128], sizes = [8, 64], strides = [1, 1]} : vector<8x256xf32> to vector<8x64xf32>
    %99 = vector.extract_strided_slice %94 {offsets = [0, 192], sizes = [8, 64], strides = [1, 1]} : vector<8x256xf32> to vector<8x64xf32>
    %100 = arith.mulf %97, %84 : vector<8x64xf32>
    %101 = arith.mulf %96, %98 : vector<8x64xf32>
    %102 = arith.addf %100, %101 : vector<8x64xf32>
    %103 = math.tanh %102 : vector<8x64xf32>
    %104 = arith.mulf %99, %103 : vector<8x64xf32>
    %105 = vector.extract_strided_slice %5 {offsets = [40, 0], sizes = [8, 256], strides = [1, 1]} : vector<72x256xf32> to vector<8x256xf32>
    %cst_20 = arith.constant dense<0.000000e+00> : vector<8x256xf32>
    %106 = tpu.matmul %104, %6, %cst_20 {dimension_numbers = #tpu.dot_dimension_numbers<[1], [0], [0], [1], [0, 0, 1, 1], [], []>} : vector<8x64xf32>, vector<64x256xf32>, vector<8x256xf32> -> vector<8x256xf32>
    %107 = arith.addf %105, %106 : vector<8x256xf32>
    %108 = arith.negf %107 : vector<8x256xf32>
    %109 = math.exp %108 : vector<8x256xf32>
    %cst_21 = arith.constant 1.000000e+00 : f32
    %110 = vector.broadcast %cst_21 : f32 to vector<8x256xf32>
    %111 = arith.addf %110, %109 : vector<8x256xf32>
    %112 = arith.divf %110, %111 : vector<8x256xf32>
    %113 = math.tanh %107 : vector<8x256xf32>
    %114 = vector.extract_strided_slice %112 {offsets = [0, 0], sizes = [8, 64], strides = [1, 1]} : vector<8x256xf32> to vector<8x64xf32>
    %115 = vector.extract_strided_slice %112 {offsets = [0, 64], sizes = [8, 64], strides = [1, 1]} : vector<8x256xf32> to vector<8x64xf32>
    %116 = vector.extract_strided_slice %113 {offsets = [0, 128], sizes = [8, 64], strides = [1, 1]} : vector<8x256xf32> to vector<8x64xf32>
    %117 = vector.extract_strided_slice %112 {offsets = [0, 192], sizes = [8, 64], strides = [1, 1]} : vector<8x256xf32> to vector<8x64xf32>
    %118 = arith.mulf %115, %102 : vector<8x64xf32>
    %119 = arith.mulf %114, %116 : vector<8x64xf32>
    %120 = arith.addf %118, %119 : vector<8x64xf32>
    %121 = math.tanh %120 : vector<8x64xf32>
    %122 = arith.mulf %117, %121 : vector<8x64xf32>
    %123 = vector.extract_strided_slice %5 {offsets = [48, 0], sizes = [8, 256], strides = [1, 1]} : vector<72x256xf32> to vector<8x256xf32>
    %cst_22 = arith.constant dense<0.000000e+00> : vector<8x256xf32>
    %124 = tpu.matmul %122, %6, %cst_22 {dimension_numbers = #tpu.dot_dimension_numbers<[1], [0], [0], [1], [0, 0, 1, 1], [], []>} : vector<8x64xf32>, vector<64x256xf32>, vector<8x256xf32> -> vector<8x256xf32>
    %125 = arith.addf %123, %124 : vector<8x256xf32>
    %126 = arith.negf %125 : vector<8x256xf32>
    %127 = math.exp %126 : vector<8x256xf32>
    %cst_23 = arith.constant 1.000000e+00 : f32
    %128 = vector.broadcast %cst_23 : f32 to vector<8x256xf32>
    %129 = arith.addf %128, %127 : vector<8x256xf32>
    %130 = arith.divf %128, %129 : vector<8x256xf32>
    %131 = math.tanh %125 : vector<8x256xf32>
    %132 = vector.extract_strided_slice %130 {offsets = [0, 0], sizes = [8, 64], strides = [1, 1]} : vector<8x256xf32> to vector<8x64xf32>
    %133 = vector.extract_strided_slice %130 {offsets = [0, 64], sizes = [8, 64], strides = [1, 1]} : vector<8x256xf32> to vector<8x64xf32>
    %134 = vector.extract_strided_slice %131 {offsets = [0, 128], sizes = [8, 64], strides = [1, 1]} : vector<8x256xf32> to vector<8x64xf32>
    %135 = vector.extract_strided_slice %130 {offsets = [0, 192], sizes = [8, 64], strides = [1, 1]} : vector<8x256xf32> to vector<8x64xf32>
    %136 = arith.mulf %133, %120 : vector<8x64xf32>
    %137 = arith.mulf %132, %134 : vector<8x64xf32>
    %138 = arith.addf %136, %137 : vector<8x64xf32>
    %139 = math.tanh %138 : vector<8x64xf32>
    %140 = arith.mulf %135, %139 : vector<8x64xf32>
    %141 = vector.extract_strided_slice %5 {offsets = [56, 0], sizes = [8, 256], strides = [1, 1]} : vector<72x256xf32> to vector<8x256xf32>
    %cst_24 = arith.constant dense<0.000000e+00> : vector<8x256xf32>
    %142 = tpu.matmul %140, %6, %cst_24 {dimension_numbers = #tpu.dot_dimension_numbers<[1], [0], [0], [1], [0, 0, 1, 1], [], []>} : vector<8x64xf32>, vector<64x256xf32>, vector<8x256xf32> -> vector<8x256xf32>
    %143 = arith.addf %141, %142 : vector<8x256xf32>
    %144 = arith.negf %143 : vector<8x256xf32>
    %145 = math.exp %144 : vector<8x256xf32>
    %cst_25 = arith.constant 1.000000e+00 : f32
    %146 = vector.broadcast %cst_25 : f32 to vector<8x256xf32>
    %147 = arith.addf %146, %145 : vector<8x256xf32>
    %148 = arith.divf %146, %147 : vector<8x256xf32>
    %149 = math.tanh %143 : vector<8x256xf32>
    %150 = vector.extract_strided_slice %148 {offsets = [0, 0], sizes = [8, 64], strides = [1, 1]} : vector<8x256xf32> to vector<8x64xf32>
    %151 = vector.extract_strided_slice %148 {offsets = [0, 64], sizes = [8, 64], strides = [1, 1]} : vector<8x256xf32> to vector<8x64xf32>
    %152 = vector.extract_strided_slice %149 {offsets = [0, 128], sizes = [8, 64], strides = [1, 1]} : vector<8x256xf32> to vector<8x64xf32>
    %153 = vector.extract_strided_slice %148 {offsets = [0, 192], sizes = [8, 64], strides = [1, 1]} : vector<8x256xf32> to vector<8x64xf32>
    %154 = arith.mulf %151, %138 : vector<8x64xf32>
    %155 = arith.mulf %150, %152 : vector<8x64xf32>
    %156 = arith.addf %154, %155 : vector<8x64xf32>
    %157 = math.tanh %156 : vector<8x64xf32>
    %158 = arith.mulf %153, %157 : vector<8x64xf32>
    %159 = vector.extract_strided_slice %5 {offsets = [64, 0], sizes = [8, 256], strides = [1, 1]} : vector<72x256xf32> to vector<8x256xf32>
    %cst_26 = arith.constant dense<0.000000e+00> : vector<8x256xf32>
    %160 = tpu.matmul %158, %6, %cst_26 {dimension_numbers = #tpu.dot_dimension_numbers<[1], [0], [0], [1], [0, 0, 1, 1], [], []>} : vector<8x64xf32>, vector<64x256xf32>, vector<8x256xf32> -> vector<8x256xf32>
    %161 = arith.addf %159, %160 : vector<8x256xf32>
    %162 = arith.negf %161 : vector<8x256xf32>
    %163 = math.exp %162 : vector<8x256xf32>
    %cst_27 = arith.constant 1.000000e+00 : f32
    %164 = vector.broadcast %cst_27 : f32 to vector<8x256xf32>
    %165 = arith.addf %164, %163 : vector<8x256xf32>
    %166 = arith.divf %164, %165 : vector<8x256xf32>
    %167 = math.tanh %161 : vector<8x256xf32>
    %168 = vector.extract_strided_slice %166 {offsets = [0, 0], sizes = [8, 64], strides = [1, 1]} : vector<8x256xf32> to vector<8x64xf32>
    %169 = vector.extract_strided_slice %166 {offsets = [0, 64], sizes = [8, 64], strides = [1, 1]} : vector<8x256xf32> to vector<8x64xf32>
    %170 = vector.extract_strided_slice %167 {offsets = [0, 128], sizes = [8, 64], strides = [1, 1]} : vector<8x256xf32> to vector<8x64xf32>
    %171 = vector.extract_strided_slice %166 {offsets = [0, 192], sizes = [8, 64], strides = [1, 1]} : vector<8x256xf32> to vector<8x64xf32>
    %172 = arith.mulf %169, %156 : vector<8x64xf32>
    %173 = arith.mulf %168, %170 : vector<8x64xf32>
    %174 = arith.addf %172, %173 : vector<8x64xf32>
    %175 = math.tanh %174 : vector<8x64xf32>
    %176 = arith.mulf %171, %175 : vector<8x64xf32>
    %177 = vector.extract_strided_slice %176 {offsets = [0, 32], sizes = [8, 32], strides = [1, 1]} : vector<8x64xf32> to vector<8x32xf32>
    %178 = vector.extract_strided_slice %177 {offsets = [0, 0], sizes = [2, 32], strides = [1, 1]} : vector<8x32xf32> to vector<2x32xf32>
    %c0_28 = arith.constant 0 : index
    %c0_29 = arith.constant 0 : index
    %179 = vector.load %arg4[%c0_28, %c0_29] : memref<128x4xf32, #tpu.memory_space<vmem>>, vector<32x4xf32>
    %cst_30 = arith.constant dense<0.000000e+00> : vector<2x4xf32>
    %180 = tpu.matmul %178, %179, %cst_30 {dimension_numbers = #tpu.dot_dimension_numbers<[1], [0], [0], [1], [0, 0, 1, 1], [], []>} : vector<2x32xf32>, vector<32x4xf32>, vector<2x4xf32> -> vector<2x4xf32>
    %181 = vector.extract_strided_slice %177 {offsets = [2, 0], sizes = [2, 32], strides = [1, 1]} : vector<8x32xf32> to vector<2x32xf32>
    %c32 = arith.constant 32 : index
    %c0_31 = arith.constant 0 : index
    %182 = vector.load %arg4[%c32, %c0_31] : memref<128x4xf32, #tpu.memory_space<vmem>>, vector<32x4xf32>
    %cst_32 = arith.constant dense<0.000000e+00> : vector<2x4xf32>
    %183 = tpu.matmul %181, %182, %cst_32 {dimension_numbers = #tpu.dot_dimension_numbers<[1], [0], [0], [1], [0, 0, 1, 1], [], []>} : vector<2x32xf32>, vector<32x4xf32>, vector<2x4xf32> -> vector<2x4xf32>
    %184 = vector.extract_strided_slice %177 {offsets = [4, 0], sizes = [2, 32], strides = [1, 1]} : vector<8x32xf32> to vector<2x32xf32>
    %c64 = arith.constant 64 : index
    %c0_33 = arith.constant 0 : index
    %185 = vector.load %arg4[%c64, %c0_33] : memref<128x4xf32, #tpu.memory_space<vmem>>, vector<32x4xf32>
    %cst_34 = arith.constant dense<0.000000e+00> : vector<2x4xf32>
    %186 = tpu.matmul %184, %185, %cst_34 {dimension_numbers = #tpu.dot_dimension_numbers<[1], [0], [0], [1], [0, 0, 1, 1], [], []>} : vector<2x32xf32>, vector<32x4xf32>, vector<2x4xf32> -> vector<2x4xf32>
    %187 = vector.extract_strided_slice %177 {offsets = [6, 0], sizes = [2, 32], strides = [1, 1]} : vector<8x32xf32> to vector<2x32xf32>
    %c96 = arith.constant 96 : index
    %c0_35 = arith.constant 0 : index
    %188 = vector.load %arg4[%c96, %c0_35] : memref<128x4xf32, #tpu.memory_space<vmem>>, vector<32x4xf32>
    %cst_36 = arith.constant dense<0.000000e+00> : vector<2x4xf32>
    %189 = tpu.matmul %187, %188, %cst_36 {dimension_numbers = #tpu.dot_dimension_numbers<[1], [0], [0], [1], [0, 0, 1, 1], [], []>} : vector<2x32xf32>, vector<32x4xf32>, vector<2x4xf32> -> vector<2x4xf32>
    %190 = arith.addf %180, %183 : vector<2x4xf32>
    %191 = arith.addf %186, %189 : vector<2x4xf32>
    %192 = arith.addf %190, %191 : vector<2x4xf32>
    %c0_37 = arith.constant 0 : index
    %c0_38 = arith.constant 0 : index
    %193 = vector.load %arg5[%c0_37, %c0_38] : memref<1x4xf32, #tpu.memory_space<vmem>>, vector<1x4xf32>
    %194 = vector.broadcast %193 : vector<1x4xf32> to vector<2x4xf32>
    %195 = arith.addf %192, %194 : vector<2x4xf32>
    %cst_39 = arith.constant dense<0xFF800000> : vector<2xf32>
    %196 = vector.multi_reduction <maximumf>, %195, %cst_39 [1] : vector<2x4xf32> to vector<2xf32>
    %197 = vector.shape_cast %196 : vector<2xf32> to vector<2x1xf32>
    %198 = vector.broadcast %197 : vector<2x1xf32> to vector<2x4xf32>
    %199 = arith.subf %195, %198 : vector<2x4xf32>
    %200 = math.exp %199 : vector<2x4xf32>
    %cst_40 = arith.constant dense<0.000000e+00> : vector<2xf32>
    %201 = vector.multi_reduction <add>, %200, %cst_40 [1] : vector<2x4xf32> to vector<2xf32>
    %202 = vector.shape_cast %201 : vector<2xf32> to vector<2x1xf32>
    %203 = tpu.reciprocal %202 : vector<2x1xf32> -> vector<2x1xf32>
    %204 = vector.broadcast %203 : vector<2x1xf32> to vector<2x4xf32>
    %205 = arith.mulf %200, %204 : vector<2x4xf32>
    %c0_41 = arith.constant 0 : index
    %c0_42 = arith.constant 0 : index
    %206 = vector.load %arg6[%c0_41, %c0_42] : memref<2x4xf32, #tpu.memory_space<vmem>>, vector<2x4xf32>
    %207 = arith.mulf %205, %206 : vector<2x4xf32>
    %cst_43 = arith.constant dense<0.000000e+00> : vector<2xf32>
    %208 = vector.multi_reduction <add>, %207, %cst_43 [1] : vector<2x4xf32> to vector<2xf32>
    %209 = vector.shape_cast %208 : vector<2xf32> to vector<2x1xf32>
    %cst_44 = arith.constant 9.99999993E-9 : f32
    %210 = vector.broadcast %cst_44 : f32 to vector<2x1xf32>
    %211 = arith.addf %209, %210 : vector<2x1xf32>
    %212 = tpu.reciprocal %211 : vector<2x1xf32> -> vector<2x1xf32>
    %213 = vector.broadcast %212 : vector<2x1xf32> to vector<2x4xf32>
    %214 = arith.mulf %207, %213 : vector<2x4xf32>
    %c0_45 = arith.constant 0 : index
    %c0_46 = arith.constant 0 : index
    %215 = vector.load %arg7[%c0_45, %c0_46] : memref<2x4xf32, #tpu.memory_space<vmem>>, vector<2x4xf32>
    tpu.vector_store %arg7[%c0_45, %c0_46], %214 {strides = array<i32>} : memref<2x4xf32, #tpu.memory_space<vmem>>, vector<2x4xf32>,
    return
  }
}

</mosaic_0001>

<llo_original>
// kernel: portfolio_lstm_forward.1
$region0: #{portfolio_lstm_forward.1}
  #allocation0 [shape = 'u32[]', space=smem, size = 0x4, offset = 0x4, fixed_abs, tag = 'smem constant byte address 0x4 - core index']
  #allocation1 [shape = 'u32[144,128]{1,0:T(1,128)}', space=vmem, size = 0x12000, scoped, tag = 'internal scratch']
  %s0 = inlined_call_operand.vmem [shape: f32[72,8], index: 0, kind: input, shape index: {}]
  %s1 = inlined_call_operand.vmem [shape: f32[8,256], index: 1, kind: input, shape index: {}]
  %s2 = inlined_call_operand.vmem [shape: f32[1,256], index: 2, kind: input, shape index: {}]
  %s3 = inlined_call_operand.vmem [shape: f32[64,256], index: 3, kind: input, shape index: {}]
  %s4 = inlined_call_operand.vmem [shape: f32[128,4], index: 4, kind: input, shape index: {}]
  %s5 = inlined_call_operand.vmem [shape: f32[1,4], index: 5, kind: input, shape index: {}]
  %s6 = inlined_call_operand.vmem [shape: f32[2,4], index: 6, kind: input, shape index: {}]
  %s7 = inlined_call_operand.hbm [shape: f32[2,4], index: 7, kind: output, shape index: {}]
  %s8 = sld [smem:[#allocation0]]
  $region38: #{portfolio_lstm_forward.1} parent=0
    _
  %s10 = ssub.s32 1, %s8
  %s11 = scalar_select 0, %s10, %s8
  $region1: #{portfolio_lstm_forward.1} parent=0
    #allocation2 [shape = 'u8[1024]{0}', space=vmem, size = 0x400, scoped, tag = 'output window, operand 0, single buffered']
    #allocation3 [shape = 's32[1]{0}', space=sflag, size = 0x4, scoped, tag = 'scoped memory for portfolio_lstm_forward.1']
    %12 = vsyncpa [#allocation3], 0
    // Predicated region
    $region2: #{portfolio_lstm_forward.1} parent=1 // pred_check
      _
    $region3: #{portfolio_lstm_forward.1} parent=1 // pred_check_branch
      %14 = sbr.rel (0) target = $region5
    $region4: #{portfolio_lstm_forward.1} parent=1 // pred_region
      _
    $region5: #{portfolio_lstm_forward.1} parent=1 // pred_fallthru
      _
    // Predicated region
    $region6: #{portfolio_lstm_forward.1} parent=1 // pred_check
      _
    $region7: #{portfolio_lstm_forward.1} parent=1 // pred_check_branch
      %16 = sbr.rel (0) target = $region9
    $region8: #{portfolio_lstm_forward.1} parent=1 // pred_region
      _
    $region9: #{portfolio_lstm_forward.1} parent=1 // pred_fallthru
      _
    // Predicated region
    $region10: #{portfolio_lstm_forward.1} parent=1 // pred_check
      _
    $region11: #{portfolio_lstm_forward.1} parent=1 // pred_check_branch
      %18 = sbr.rel (0) target = $region13
    $region12: #{portfolio_lstm_forward.1} parent=1 // pred_region
      _
    $region13: #{portfolio_lstm_forward.1} parent=1 // pred_fallthru
      _
    // Predicated region
    $region14: #{portfolio_lstm_forward.1} parent=1 // pred_check
      _
    $region15: #{portfolio_lstm_forward.1} parent=1 // pred_check_branch
      %20 = sbr.rel (0) target = $region17
    $region16: #{portfolio_lstm_forward.1} parent=1 // pred_region
      _
    $region17: #{portfolio_lstm_forward.1} parent=1 // pred_fallthru
      _
    // Predicated region
    $region18: #{portfolio_lstm_forward.1} parent=1 // pred_check
      _
    $region19: #{portfolio_lstm_forward.1} parent=1 // pred_check_branch
      %22 = sbr.rel (0) target = $region21
    $region20: #{portfolio_lstm_forward.1} parent=1 // pred_region
      _
    $region21: #{portfolio_lstm_forward.1} parent=1 // pred_fallthru
      _
    // Predicated region
    $region22: #{portfolio_lstm_forward.1} parent=1 // pred_check
      _
    $region23: #{portfolio_lstm_forward.1} parent=1 // pred_check_branch
      %24 = sbr.rel (0) target = $region25
    $region24: #{portfolio_lstm_forward.1} parent=1 // pred_region
      _
    $region25: #{portfolio_lstm_forward.1} parent=1 // pred_fallthru
      _
    // Predicated region
    $region26: #{portfolio_lstm_forward.1} parent=1 // pred_check
      _
    $region27: #{portfolio_lstm_forward.1} parent=1 // pred_check_branch
      %26 = sbr.rel (0) target = $region29
    $region28: #{portfolio_lstm_forward.1} parent=1 // pred_region
      _
    $region29: #{portfolio_lstm_forward.1} parent=1 // pred_fallthru
      _
    %v27 = vld [vmem:[%s0] sm:$0xff]
    %v28 = vld [vmem:[%s0 + $0x8] sm:$0xff]
    %v29 = vld [vmem:[%s0 + $0x10] sm:$0xff]
    %v30 = vld [vmem:[%s0 + $0x18] sm:$0xff]
    %v31 = vld [vmem:[%s0 + $0x20] sm:$0xff]
    %v32 = vld [vmem:[%s0 + $0x28] sm:$0xff]
    %v33 = vld [vmem:[%s0 + $0x30] sm:$0xff]
    %v34 = vld [vmem:[%s0 + $0x38] sm:$0xff]
    %v35 = vld [vmem:[%s0 + $0x40] sm:$0xff]
    %v36 = vld [vmem:[%s1] sm:$0xff]
    %v37 = vld [vmem:[%s1 + $0x8] sm:$0xff]
    %v38 = vld [vmem:[%s2] sm:$0x3]
    %v40 = vlaneseq
    %v41 = vshrl.u32 %v40, 7
    %v42 = vsub.s32 0, %v41
    %v43 = vrot.slane %v38, %v42
    %v44 = vlaneseq
    %v45 = vshrl.u32 %v44, 7
    %v46 = vsub.s32 1, %v45
    %v47 = vrot.slane %v38, %v46
    %vm50 = vcmask 64512
    %v52 = vsel %vm50, %v27, 0
    %v55 = vsel %vm50, %v28, 0
    %v58 = vsel %vm50, %v29, 0
    %v61 = vsel %vm50, %v30, 0
    %v64 = vsel %vm50, %v31, 0
    %v67 = vsel %vm50, %v32, 0
    %v70 = vsel %vm50, %v33, 0
    %v73 = vsel %vm50, %v34, 0
    %v76 = vsel %vm50, %v35, 0
    %78 = vmatprep.subr.mxu0 %v37
    %79 = vmatpush1.msra.mxu0 %v36
    %80 = vmatprep.subr.mxu0 0.0
    %81 = vmatpush1.msra.mxu0 0.0
    %82 = vmatprep.subr.mxu0 0.0
    %83 = vmatpush1.msra.mxu0 0.0
    %84 = vmatprep.subr.mxu0 0.0
    %85 = vmatpush1.msra.mxu0 0.0
    %86 = vmatprep.subr.mxu0 0.0
    %87 = vmatpush1.msra.mxu0 0.0
    %88 = vmatprep.subr.mxu0 0.0
    %89 = vmatpush1.msra.mxu0 0.0
    %90 = vmatprep.subr.mxu0 0.0
    %91 = vmatpush1.msra.mxu0 0.0
    %92 = vmatprep.subr.mxu0 0.0
    %93 = vmatpush1.msra.mxu0 0.0
    %94 = vmatprep.subr.mxu0 0.0
    %95 = vmatpush1.msra.mxu0 0.0
    %96 = vmatprep.subr.mxu0 0.0
    %97 = vmatpush1.msra.mxu0 0.0
    %98 = vmatprep.subr.mxu0 0.0
    %99 = vmatpush1.msra.mxu0 0.0
    %100 = vmatprep.subr.mxu0 0.0
    %101 = vmatpush1.msra.mxu0 0.0
    %102 = vmatprep.subr.mxu0 0.0
    %103 = vmatpush1.msra.mxu0 0.0
    %104 = vmatprep.subr.mxu0 0.0
    %105 = vmatpush1.msra.mxu0 0.0
    %106 = vmatprep.subr.mxu0 0.0
    %107 = vmatpush1.msra.mxu0 0.0
    %108 = vmatprep.subr.mxu0 0.0
    %109 = vmatpush1.msra.mxu0 0.0
    %110 = vmatprep.subr.mxu0 0.0
    %111 = vmatpush1.msra.mxu0 0.0
    %112 = vmatprep.subr.mxu0 0.0
    %113 = vmatpush1.msra.mxu0 0.0
    %114 = vmatprep.subr.mxu0 0.0
    %115 = vmatpush1.msra.mxu0 0.0
    %116 = vmatprep.subr.mxu0 0.0
    %117 = vmatpush1.msra.mxu0 0.0
    %118 = vmatprep.subr.mxu0 0.0
    %119 = vmatpush1.msra.mxu0 0.0
    %120 = vmatprep.subr.mxu0 0.0
    %121 = vmatpush1.msra.mxu0 0.0
    %122 = vmatprep.subr.mxu0 0.0
    %123 = vmatpush1.msra.mxu0 0.0
    %124 = vmatprep.subr.mxu0 0.0
    %125 = vmatpush1.msra.mxu0 0.0
    %126 = vmatprep.subr.mxu0 0.0
    %127 = vmatpush1.msra.mxu0 0.0
    %128 = vmatprep.subr.mxu0 0.0
    %129 = vmatpush1.msra.mxu0 0.0
    %130 = vmatprep.subr.mxu0 0.0
    %131 = vmatpush1.msra.mxu0 0.0
    %132 = vmatprep.subr.mxu0 0.0
    %133 = vmatpush1.msra.mxu0 0.0
    %134 = vmatprep.subr.mxu0 0.0
    %135 = vmatpush1.msra.mxu0 0.0
    %136 = vmatprep.subr.mxu0 0.0
    %137 = vmatpush1.msra.mxu0 0.0
    %138 = vmatprep.subr.mxu0 0.0
    %139 = vmatpush1.msra.mxu0 0.0
    %140 = vmatprep.subr.mxu0 0.0
    %141 = vmatpush1.msra.mxu0 0.0
    %142 = vmatprep.mubr.f32.mxu0 0.0
    %143 = vmatmul.mubr.f32.gmra.mrb[0].mxu0 %v52
    %v144 = vpop.f32.mrb[0].mxu0
    %v145 = vadd.f32 %v43, %v144
    %v146 = vpop.f32.mrb[0].mxu0
    %v147 = vadd.f32 %v47, %v146
    %148 = vmatprep.mubr.f32.mxu0 0.0
    %149 = vmatmul.mubr.f32.gmra.mrb[0].mxu0 %v55
    %v150 = vpop.f32.mrb[0].mxu0
    %v151 = vadd.f32 %v43, %v150
    %v152 = vpop.f32.mrb[0].mxu0
    %v153 = vadd.f32 %v47, %v152
    %154 = vmatprep.mubr.f32.mxu0 0.0
    %155 = vmatmul.mubr.f32.gmra.mrb[0].mxu0 %v58
    %v156 = vpop.f32.mrb[0].mxu0
    %v157 = vadd.f32 %v43, %v156
    %v158 = vpop.f32.mrb[0].mxu0
    %v159 = vadd.f32 %v47, %v158
    %160 = vmatprep.mubr.f32.mxu0 0.0
    %161 = vmatmul.mubr.f32.gmra.mrb[0].mxu0 %v61
    %v162 = vpop.f32.mrb[0].mxu0
    %v163 = vadd.f32 %v43, %v162
    %v164 = vpop.f32.mrb[0].mxu0
    %v165 = vadd.f32 %v47, %v164
    %166 = vmatprep.mubr.f32.mxu0 0.0
    %167 = vmatmul.mubr.f32.gmra.mrb[0].mxu0 %v64
    %v168 = vpop.f32.mrb[0].mxu0
    %v169 = vadd.f32 %v43, %v168
    %v170 = vpop.f32.mrb[0].mxu0
    %v171 = vadd.f32 %v47, %v170
    %172 = vmatprep.mubr.f32.mxu0 0.0
    %173 = vmatmul.mubr.f32.gmra.mrb[0].mxu0 %v67
    %v174 = vpop.f32.mrb[0].mxu0
    %v175 = vadd.f32 %v43, %v174
    %v176 = vpop.f32.mrb[0].mxu0
    %v177 = vadd.f32 %v47, %v176
    %178 = vmatprep.mubr.f32.mxu0 0.0
    %179 = vmatmul.mubr.f32.gmra.mrb[0].mxu0 %v70
    %v180 = vpop.f32.mrb[0].mxu0
    %v181 = vadd.f32 %v43, %v180
    %v182 = vpop.f32.mrb[0].mxu0
    %v183 = vadd.f32 %v47, %v182
    %184 = vmatprep.mubr.f32.mxu0 0.0
    %185 = vmatmul.mubr.f32.gmra.mrb[0].mxu0 %v73
    %v186 = vpop.f32.mrb[0].mxu0
    %v187 = vadd.f32 %v43, %v186
    %v188 = vpop.f32.mrb[0].mxu0
    %v189 = vadd.f32 %v47, %v188
    %190 = vmatprep.mubr.f32.mxu0 0.0
    %191 = vmatmul.mubr.f32.gmra.mrb[0].mxu0 %v76
    %v192 = vpop.f32.mrb[0].mxu0
    %v193 = vadd.f32 %v43, %v192
    %v194 = vpop.f32.mrb[0].mxu0
    %v195 = vadd.f32 %v47, %v194
    %196 = vdwg.mxu0
    %v197 = vld [vmem:[%s3] sm:$0xff]
    %v198 = vld [vmem:[%s3 + $0x8] sm:$0xff]
    %v199 = vld [vmem:[%s3 + $0x10] sm:$0xff]
    %v200 = vld [vmem:[%s3 + $0x18] sm:$0xff]
    %v201 = vld [vmem:[%s3 + $0x20] sm:$0xff]
    %v202 = vld [vmem:[%s3 + $0x28] sm:$0xff]
    %v203 = vld [vmem:[%s3 + $0x30] sm:$0xff]
    %v204 = vld [vmem:[%s3 + $0x38] sm:$0xff]
    %v205 = vld [vmem:[%s3 + $0x40] sm:$0xff]
    %v206 = vld [vmem:[%s3 + $0x48] sm:$0xff]
    %v207 = vld [vmem:[%s3 + $0x50] sm:$0xff]
    %v208 = vld [vmem:[%s3 + $0x58] sm:$0xff]
    %v209 = vld [vmem:[%s3 + $0x60] sm:$0xff]
    %v210 = vld [vmem:[%s3 + $0x68] sm:$0xff]
    %v211 = vld [vmem:[%s3 + $0x70] sm:$0xff]
    %v212 = vld [vmem:[%s3 + $0x78] sm:$0xff]
    %v213 = vlaneseq
    %v214 = vand.u32 %v213, 127
    %v215 = vxor.u32 %v145, 2147483648
    %v216 = vxor.u32 %v147, 2147483648
    %v217 = vmul.f32 %v215, 1.442695
    %v218 = vpow.pop %v217
    %v219 = vmul.f32 %v216, 1.442695
    %v220 = vpow.pop %v219
    %v221 = vadd.f32 %v218, 1.0
    %v222 = vadd.f32 %v220, 1.0
    %v223 = vrcp.pop %v221
    %v224 = vmul.f32 1.0, %v223
    %v225 = vrcp.pop %v222
    %v226 = vmul.f32 1.0, %v225
    %v227 = vtanh.pop %v147
    %v228 = vmul.f32 %v224, 0.0
    %v229 = vmul.f32 %v224, %v227
    %231 = vrot.lane.b32.xlu0 %v229, 64
    %v232 = vpop.permute.xlu0 %231
    %v234 = vadd.f32 %v228, %v232
    %v235 = vtanh.pop %v234
    %v236 = vmul.f32 %v226, %v235
    %vm237 = vcmp.lt.s32.totalorder %v214, 32
    %239 = vrot.lane.b32.xlu0 %v236, 64
    %v240 = vpop.permute.xlu0 %239
    %v242 = vsel %vm237, %v240, 0.0
    %244 = vrot.lane.b32.xlu0 %v234, 64
    %v245 = vpop.permute.xlu0 %244
    %v247 = vsel %vm237, %v245, 0.0
    %vm248 = vcmask 523264
    %v250 = vsel %vm248, %v242, 0
    %252 = vmatprep.subr.mxu0 %v198
    %253 = vmatpush1.msra.mxu0 %v197
    %254 = vmatprep.subr.mxu0 %v200
    %255 = vmatpush1.msra.mxu0 %v199
    %256 = vmatprep.subr.mxu0 %v202
    %257 = vmatpush1.msra.mxu0 %v201
    %258 = vmatprep.subr.mxu0 %v204
    %259 = vmatpush1.msra.mxu0 %v203
    %260 = vmatprep.subr.mxu0 %v206
    %261 = vmatpush1.msra.mxu0 %v205
    %262 = vmatprep.subr.mxu0 %v208
    %263 = vmatpush1.msra.mxu0 %v207
    %264 = vmatprep.subr.mxu0 %v210
    %265 = vmatpush1.msra.mxu0 %v209
    %266 = vmatprep.subr.mxu0 %v212
    %267 = vmatpush1.msra.mxu0 %v211
    %268 = vmatprep.subr.mxu0 0.0
    %269 = vmatpush1.msra.mxu0 0.0
    %270 = vmatprep.subr.mxu0 0.0
    %271 = vmatpush1.msra.mxu0 0.0
    %272 = vmatprep.subr.mxu0 0.0
    %273 = vmatpush1.msra.mxu0 0.0
    %274 = vmatprep.subr.mxu0 0.0
    %275 = vmatpush1.msra.mxu0 0.0
    %276 = vmatprep.subr.mxu0 0.0
    %277 = vmatpush1.msra.mxu0 0.0
    %278 = vmatprep.subr.mxu0 0.0
    %279 = vmatpush1.msra.mxu0 0.0
    %280 = vmatprep.subr.mxu0 0.0
    %281 = vmatpush1.msra.mxu0 0.0
    %282 = vmatprep.subr.mxu0 0.0
    %283 = vmatpush1.msra.mxu0 0.0
    %284 = vmatprep.subr.mxu0 0.0
    %285 = vmatpush1.msra.mxu0 0.0
    %286 = vmatprep.subr.mxu0 0.0
    %287 = vmatpush1.msra.mxu0 0.0
    %288 = vmatprep.subr.mxu0 0.0
    %289 = vmatpush1.msra.mxu0 0.0
    %290 = vmatprep.subr.mxu0 0.0
    %291 = vmatpush1.msra.mxu0 0.0
    %292 = vmatprep.subr.mxu0 0.0
    %293 = vmatpush1.msra.mxu0 0.0
    %294 = vmatprep.subr.mxu0 0.0
    %295 = vmatpush1.msra.mxu0 0.0
    %296 = vmatprep.subr.mxu0 0.0
    %297 = vmatpush1.msra.mxu0 0.0
    %298 = vmatprep.subr.mxu0 0.0
    %299 = vmatpush1.msra.mxu0 0.0
    %300 = vmatprep.subr.mxu0 0.0
    %301 = vmatpush1.msra.mxu0 0.0
    %302 = vmatprep.subr.mxu0 0.0
    %303 = vmatpush1.msra.mxu0 0.0
    %304 = vmatprep.subr.mxu0 0.0
    %305 = vmatpush1.msra.mxu0 0.0
    %306 = vmatprep.subr.mxu0 0.0
    %307 = vmatpush1.msra.mxu0 0.0
    %308 = vmatprep.subr.mxu0 0.0
    %309 = vmatpush1.msra.mxu0 0.0
    %310 = vmatprep.subr.mxu0 0.0
    %311 = vmatpush1.msra.mxu0 0.0
    %312 = vmatprep.subr.mxu0 0.0
    %313 = vmatpush1.msra.mxu0 0.0
    %314 = vmatprep.subr.mxu0 0.0
    %315 = vmatpush1.msra.mxu0 0.0
    %316 = vmatprep.mubr.f32.mxu0 0.0
    %317 = vmatmul.mubr.f32.gmra.mrb[0].mxu0 %v250
    %v318 = vpop.f32.mrb[0].mxu0
    %v319 = vadd.f32 0.0, %v318
    %v320 = vpop.f32.mrb[0].mxu0
    %v321 = vadd.f32 0.0, %v320
    %322 = vdwg.mxu0
    %v323 = vadd.f32 %v151, %v319
    %v324 = vadd.f32 %v153, %v321
    %v325 = vxor.u32 %v323, 2147483648
    %v326 = vxor.u32 %v324, 2147483648
    %v327 = vmul.f32 %v325, 1.442695
    %v328 = vpow.pop %v327
    %v329 = vmul.f32 %v326, 1.442695
    %v330 = vpow.pop %v329
    %v331 = vadd.f32 %v328, 1.0
    %v332 = vadd.f32 %v330, 1.0
    %v333 = vrcp.pop %v331
    %v334 = vmul.f32 1.0, %v333
    %v335 = vrcp.pop %v332
    %v336 = vmul.f32 1.0, %v335
    %v337 = vtanh.pop %v324
    %339 = vrot.lane.b32.xlu0 %v247, 64
    %v340 = vpop.permute.xlu0 %339
    %v342 = vmul.f32 %v334, %v340
    %v343 = vmul.f32 %v334, %v337
    %345 = vrot.lane.b32.xlu0 %v343, 64
    %v346 = vpop.permute.xlu0 %345
    %v348 = vadd.f32 %v342, %v346
    %v349 = vtanh.pop %v348
    %v350 = vmul.f32 %v336, %v349
    %352 = vrot.lane.b32.xlu0 %v350, 64
    %v353 = vpop.permute.xlu0 %352
    %v354 = vsel %vm248, %v353, 0
    %356 = vmatprep.subr.mxu0 %v198
    %357 = vmatpush1.msra.mxu0 %v197
    %358 = vmatprep.subr.mxu0 %v200
    %359 = vmatpush1.msra.mxu0 %v199
    %360 = vmatprep.subr.mxu0 %v202
    %361 = vmatpush1.msra.mxu0 %v201
    %362 = vmatprep.subr.mxu0 %v204
    %363 = vmatpush1.msra.mxu0 %v203
    %364 = vmatprep.subr.mxu0 %v206
    %365 = vmatpush1.msra.mxu0 %v205
    %366 = vmatprep.subr.mxu0 %v208
    %367 = vmatpush1.msra.mxu0 %v207
    %368 = vmatprep.subr.mxu0 %v210
    %369 = vmatpush1.msra.mxu0 %v209
    %370 = vmatprep.subr.mxu0 %v212
    %371 = vmatpush1.msra.mxu0 %v211
    %372 = vmatprep.subr.mxu0 0.0
    %373 = vmatpush1.msra.mxu0 0.0
    %374 = vmatprep.subr.mxu0 0.0
    %375 = vmatpush1.msra.mxu0 0.0
    %376 = vmatprep.subr.mxu0 0.0
    %377 = vmatpush1.msra.mxu0 0.0
    %378 = vmatprep.subr.mxu0 0.0
    %379 = vmatpush1.msra.mxu0 0.0
    %380 = vmatprep.subr.mxu0 0.0
    %381 = vmatpush1.msra.mxu0 0.0
    %382 = vmatprep.subr.mxu0 0.0
    %383 = vmatpush1.msra.mxu0 0.0
    %384 = vmatprep.subr.mxu0 0.0
    %385 = vmatpush1.msra.mxu0 0.0
    %386 = vmatprep.subr.mxu0 0.0
    %387 = vmatpush1.msra.mxu0 0.0
    %388 = vmatprep.subr.mxu0 0.0
    %389 = vmatpush1.msra.mxu0 0.0
    %390 = vmatprep.subr.mxu0 0.0
    %391 = vmatpush1.msra.mxu0 0.0
    %392 = vmatprep.subr.mxu0 0.0
    %393 = vmatpush1.msra.mxu0 0.0
    %394 = vmatprep.subr.mxu0 0.0
    %395 = vmatpush1.msra.mxu0 0.0
    %396 = vmatprep.subr.mxu0 0.0
    %397 = vmatpush1.msra.mxu0 0.0
    %398 = vmatprep.subr.mxu0 0.0
    %399 = vmatpush1.msra.mxu0 0.0
    %400 = vmatprep.subr.mxu0 0.0
    %401 = vmatpush1.msra.mxu0 0.0
    %402 = vmatprep.subr.mxu0 0.0
    %403 = vmatpush1.msra.mxu0 0.0
    %404 = vmatprep.subr.mxu0 0.0
    %405 = vmatpush1.msra.mxu0 0.0
    %406 = vmatprep.subr.mxu0 0.0
    %407 = vmatpush1.msra.mxu0 0.0
    %408 = vmatprep.subr.mxu0 0.0
    %409 = vmatpush1.msra.mxu0 0.0
    %410 = vmatprep.subr.mxu0 0.0
    %411 = vmatpush1.msra.mxu0 0.0
    %412 = vmatprep.subr.mxu0 0.0
    %413 = vmatpush1.msra.mxu0 0.0
    %414 = vmatprep.subr.mxu0 0.0
    %415 = vmatpush1.msra.mxu0 0.0
    %416 = vmatprep.subr.mxu0 0.0
    %417 = vmatpush1.msra.mxu0 0.0
    %418 = vmatprep.subr.mxu0 0.0
    %419 = vmatpush1.msra.mxu0 0.0
    %420 = vmatprep.mubr.f32.mxu0 0.0
    %421 = vmatmul.mubr.f32.gmra.mrb[0].mxu0 %v354
    %v422 = vpop.f32.mrb[0].mxu0
    %v423 = vadd.f32 0.0, %v422
    %v424 = vpop.f32.mrb[0].mxu0
    %v425 = vadd.f32 0.0, %v424
    %426 = vdwg.mxu0
    %v427 = vadd.f32 %v157, %v423
    %v428 = vadd.f32 %v159, %v425
    %v429 = vxor.u32 %v427, 2147483648
    %v430 = vxor.u32 %v428, 2147483648
    %v431 = vmul.f32 %v429, 1.442695
    %v432 = vpow.pop %v431
    %v433 = vmul.f32 %v430, 1.442695
    %v434 = vpow.pop %v433
    %v435 = vadd.f32 %v432, 1.0
    %v436 = vadd.f32 %v434, 1.0
    %v437 = vrcp.pop %v435
    %v438 = vmul.f32 1.0, %v437
    %v439 = vrcp.pop %v436
    %v440 = vmul.f32 1.0, %v439
    %v441 = vtanh.pop %v428
    %v442 = vmul.f32 %v438, %v348
    %v443 = vmul.f32 %v438, %v441
    %445 = vrot.lane.b32.xlu0 %v443, 64
    %v446 = vpop.permute.xlu0 %445
    %v448 = vadd.f32 %v442, %v446
    %v449 = vtanh.pop %v448
    %v450 = vmul.f32 %v440, %v449
    %452 = vrot.lane.b32.xlu0 %v450, 64
    %v453 = vpop.permute.xlu0 %452
    %v454 = vsel %vm248, %v453, 0
    %456 = vmatprep.subr.mxu0 %v198
    %457 = vmatpush1.msra.mxu0 %v197
    %458 = vmatprep.subr.mxu0 %v200
    %459 = vmatpush1.msra.mxu0 %v199
    %460 = vmatprep.subr.mxu0 %v202
    %461 = vmatpush1.msra.mxu0 %v201
    %462 = vmatprep.subr.mxu0 %v204
    %463 = vmatpush1.msra.mxu0 %v203
    %464 = vmatprep.subr.mxu0 %v206
    %465 = vmatpush1.msra.mxu0 %v205
    %466 = vmatprep.subr.mxu0 %v208
    %467 = vmatpush1.msra.mxu0 %v207
    %468 = vmatprep.subr.mxu0 %v210
    %469 = vmatpush1.msra.mxu0 %v209
    %470 = vmatprep.subr.mxu0 %v212
    %471 = vmatpush1.msra.mxu0 %v211
    %472 = vmatprep.subr.mxu0 0.0
    %473 = vmatpush1.msra.mxu0 0.0
    %474 = vmatprep.subr.mxu0 0.0
    %475 = vmatpush1.msra.mxu0 0.0
    %476 = vmatprep.subr.mxu0 0.0
    %477 = vmatpush1.msra.mxu0 0.0
    %478 = vmatprep.subr.mxu0 0.0
    %479 = vmatpush1.msra.mxu0 0.0
    %480 = vmatprep.subr.mxu0 0.0
    %481 = vmatpush1.msra.mxu0 0.0
    %482 = vmatprep.subr.mxu0 0.0
    %483 = vmatpush1.msra.mxu0 0.0
    %484 = vmatprep.subr.mxu0 0.0
    %485 = vmatpush1.msra.mxu0 0.0
    %486 = vmatprep.subr.mxu0 0.0
    %487 = vmatpush1.msra.mxu0 0.0
    %488 = vmatprep.subr.mxu0 0.0
    %489 = vmatpush1.msra.mxu0 0.0
    %490 = vmatprep.subr.mxu0 0.0
    %491 = vmatpush1.msra.mxu0 0.0
    %492 = vmatprep.subr.mxu0 0.0
    %493 = vmatpush1.msra.mxu0 0.0
    %494 = vmatprep.subr.mxu0 0.0
    %495 = vmatpush1.msra.mxu0 0.0
    %496 = vmatprep.subr.mxu0 0.0
    %497 = vmatpush1.msra.mxu0 0.0
    %498 = vmatprep.subr.mxu0 0.0
    %499 = vmatpush1.msra.mxu0 0.0
    %500 = vmatprep.subr.mxu0 0.0
    %501 = vmatpush1.msra.mxu0 0.0
    %502 = vmatprep.subr.mxu0 0.0
    %503 = vmatpush1.msra.mxu0 0.0
    %504 = vmatprep.subr.mxu0 0.0
    %505 = vmatpush1.msra.mxu0 0.0
    %506 = vmatprep.subr.mxu0 0.0
    %507 = vmatpush1.msra.mxu0 0.0
    %508 = vmatprep.subr.mxu0 0.0
    %509 = vmatpush1.msra.mxu0 0.0
    %510 = vmatprep.subr.mxu0 0.0
    %511 = vmatpush1.msra.mxu0 0.0
    %512 = vmatprep.subr.mxu0 0.0
    %513 = vmatpush1.msra.mxu0 0.0
    %514 = vmatprep.subr.mxu0 0.0
    %515 = vmatpush1.msra.mxu0 0.0
    %516 = vmatprep.subr.mxu0 0.0
    %517 = vmatpush1.msra.mxu0 0.0
    %518 = vmatprep.subr.mxu0 0.0
    %519 = vmatpush1.msra.mxu0 0.0
    %520 = vmatprep.mubr.f32.mxu0 0.0
    %521 = vmatmul.mubr.f32.gmra.mrb[0].mxu0 %v454
    %v522 = vpop.f32.mrb[0].mxu0
    %v523 = vadd.f32 0.0, %v522
    %v524 = vpop.f32.mrb[0].mxu0
    %v525 = vadd.f32 0.0, %v524
    %526 = vdwg.mxu0
    %v527 = vadd.f32 %v163, %v523
    %v528 = vadd.f32 %v165, %v525
    %v529 = vxor.u32 %v527, 2147483648
    %v530 = vxor.u32 %v528, 2147483648
    %v531 = vmul.f32 %v529, 1.442695
    %v532 = vpow.pop %v531
    %v533 = vmul.f32 %v530, 1.442695
    %v534 = vpow.pop %v533
    %v535 = vadd.f32 %v532, 1.0
    %v536 = vadd.f32 %v534, 1.0
    %v537 = vrcp.pop %v535
    %v538 = vmul.f32 1.0, %v537
    %v539 = vrcp.pop %v536
    %v540 = vmul.f32 1.0, %v539
    %v541 = vtanh.pop %v528
    %v542 = vmul.f32 %v538, %v448
    %v543 = vmul.f32 %v538, %v541
    %545 = vrot.lane.b32.xlu0 %v543, 64
    %v546 = vpop.permute.xlu0 %545
    %v548 = vadd.f32 %v542, %v546
    %v549 = vtanh.pop %v548
    %v550 = vmul.f32 %v540, %v549
    %552 = vrot.lane.b32.xlu0 %v550, 64
    %v553 = vpop.permute.xlu0 %552
    %v554 = vsel %vm248, %v553, 0
    %556 = vmatprep.subr.mxu0 %v198
    %557 = vmatpush1.msra.mxu0 %v197
    %558 = vmatprep.subr.mxu0 %v200
    %559 = vmatpush1.msra.mxu0 %v199
    %560 = vmatprep.subr.mxu0 %v202
    %561 = vmatpush1.msra.mxu0 %v201
    %562 = vmatprep.subr.mxu0 %v204
    %563 = vmatpush1.msra.mxu0 %v203
    %564 = vmatprep.subr.mxu0 %v206
    %565 = vmatpush1.msra.mxu0 %v205
    %566 = vmatprep.subr.mxu0 %v208
    %567 = vmatpush1.msra.mxu0 %v207
    %568 = vmatprep.subr.mxu0 %v210
    %569 = vmatpush1.msra.mxu0 %v209
    %570 = vmatprep.subr.mxu0 %v212
    %571 = vmatpush1.msra.mxu0 %v211
    %572 = vmatprep.subr.mxu0 0.0
    %573 = vmatpush1.msra.mxu0 0.0
    %574 = vmatprep.subr.mxu0 0.0
    %575 = vmatpush1.msra.mxu0 0.0
    %576 = vmatprep.subr.mxu0 0.0
    %577 = vmatpush1.msra.mxu0 0.0
    %578 = vmatprep.subr.mxu0 0.0
    %579 = vmatpush1.msra.mxu0 0.0
    %580 = vmatprep.subr.mxu0 0.0
    %581 = vmatpush1.msra.mxu0 0.0
    %582 = vmatprep.subr.mxu0 0.0
    %583 = vmatpush1.msra.mxu0 0.0
    %584 = vmatprep.subr.mxu0 0.0
    %585 = vmatpush1.msra.mxu0 0.0
    %586 = vmatprep.subr.mxu0 0.0
    %587 = vmatpush1.msra.mxu0 0.0
    %588 = vmatprep.subr.mxu0 0.0
    %589 = vmatpush1.msra.mxu0 0.0
    %590 = vmatprep.subr.mxu0 0.0
    %591 = vmatpush1.msra.mxu0 0.0
    %592 = vmatprep.subr.mxu0 0.0
    %593 = vmatpush1.msra.mxu0 0.0
    %594 = vmatprep.subr.mxu0 0.0
    %595 = vmatpush1.msra.mxu0 0.0
    %596 = vmatprep.subr.mxu0 0.0
    %597 = vmatpush1.msra.mxu0 0.0
    %598 = vmatprep.subr.mxu0 0.0
    %599 = vmatpush1.msra.mxu0 0.0
    %600 = vmatprep.subr.mxu0 0.0
    %601 = vmatpush1.msra.mxu0 0.0
    %602 = vmatprep.subr.mxu0 0.0
    %603 = vmatpush1.msra.mxu0 0.0
    %604 = vmatprep.subr.mxu0 0.0
    %605 = vmatpush1.msra.mxu0 0.0
    %606 = vmatprep.subr.mxu0 0.0
    %607 = vmatpush1.msra.mxu0 0.0
    %608 = vmatprep.subr.mxu0 0.0
    %609 = vmatpush1.msra.mxu0 0.0
    %610 = vmatprep.subr.mxu0 0.0
    %611 = vmatpush1.msra.mxu0 0.0
    %612 = vmatprep.subr.mxu0 0.0
    %613 = vmatpush1.msra.mxu0 0.0
    %614 = vmatprep.subr.mxu0 0.0
    %615 = vmatpush1.msra.mxu0 0.0
    %616 = vmatprep.subr.mxu0 0.0
    %617 = vmatpush1.msra.mxu0 0.0
    %618 = vmatprep.subr.mxu0 0.0
    %619 = vmatpush1.msra.mxu0 0.0
    %620 = vmatprep.mubr.f32.mxu0 0.0
    %621 = vmatmul.mubr.f32.gmra.mrb[0].mxu0 %v554
    %v622 = vpop.f32.mrb[0].mxu0
    %v623 = vadd.f32 0.0, %v622
    %v624 = vpop.f32.mrb[0].mxu0
    %v625 = vadd.f32 0.0, %v624
    %626 = vdwg.mxu0
    %v627 = vadd.f32 %v169, %v623
    %v628 = vadd.f32 %v171, %v625
    %v629 = vxor.u32 %v627, 2147483648
    %v630 = vxor.u32 %v628, 2147483648
    %v631 = vmul.f32 %v629, 1.442695
    %v632 = vpow.pop %v631
    %v633 = vmul.f32 %v630, 1.442695
    %v634 = vpow.pop %v633
    %v635 = vadd.f32 %v632, 1.0
    %v636 = vadd.f32 %v634, 1.0
    %v637 = vrcp.pop %v635
    %v638 = vmul.f32 1.0, %v637
    %v639 = vrcp.pop %v636
    %v640 = vmul.f32 1.0, %v639
    %v641 = vtanh.pop %v628
    %v642 = vmul.f32 %v638, %v548
    %v643 = vmul.f32 %v638, %v641
    %645 = vrot.lane.b32.xlu0 %v643, 64
    %v646 = vpop.permute.xlu0 %645
    %v648 = vadd.f32 %v642, %v646
    %v649 = vtanh.pop %v648
    %v650 = vmul.f32 %v640, %v649
    %652 = vrot.lane.b32.xlu0 %v650, 64
    %v653 = vpop.permute.xlu0 %652
    %v654 = vsel %vm248, %v653, 0
    %656 = vmatprep.subr.mxu0 %v198
    %657 = vmatpush1.msra.mxu0 %v197
    %658 = vmatprep.subr.mxu0 %v200
    %659 = vmatpush1.msra.mxu0 %v199
    %660 = vmatprep.subr.mxu0 %v202
    %661 = vmatpush1.msra.mxu0 %v201
    %662 = vmatprep.subr.mxu0 %v204
    %663 = vmatpush1.msra.mxu0 %v203
    %664 = vmatprep.subr.mxu0 %v206
    %665 = vmatpush1.msra.mxu0 %v205
    %666 = vmatprep.subr.mxu0 %v208
    %667 = vmatpush1.msra.mxu0 %v207
    %668 = vmatprep.subr.mxu0 %v210
    %669 = vmatpush1.msra.mxu0 %v209
    %670 = vmatprep.subr.mxu0 %v212
    %671 = vmatpush1.msra.mxu0 %v211
    %672 = vmatprep.subr.mxu0 0.0
    %673 = vmatpush1.msra.mxu0 0.0
    %674 = vmatprep.subr.mxu0 0.0
    %675 = vmatpush1.msra.mxu0 0.0
    %676 = vmatprep.subr.mxu0 0.0
    %677 = vmatpush1.msra.mxu0 0.0
    %678 = vmatprep.subr.mxu0 0.0
    %679 = vmatpush1.msra.mxu0 0.0
    %680 = vmatprep.subr.mxu0 0.0
    %681 = vmatpush1.msra.mxu0 0.0
    %682 = vmatprep.subr.mxu0 0.0
    %683 = vmatpush1.msra.mxu0 0.0
    %684 = vmatprep.subr.mxu0 0.0
    %685 = vmatpush1.msra.mxu0 0.0
    %686 = vmatprep.subr.mxu0 0.0
    %687 = vmatpush1.msra.mxu0 0.0
    %688 = vmatprep.subr.mxu0 0.0
    %689 = vmatpush1.msra.mxu0 0.0
    %690 = vmatprep.subr.mxu0 0.0
    %691 = vmatpush1.msra.mxu0 0.0
    %692 = vmatprep.subr.mxu0 0.0
    %693 = vmatpush1.msra.mxu0 0.0
    %694 = vmatprep.subr.mxu0 0.0
    %695 = vmatpush1.msra.mxu0 0.0
    %696 = vmatprep.subr.mxu0 0.0
    %697 = vmatpush1.msra.mxu0 0.0
    %698 = vmatprep.subr.mxu0 0.0
    %699 = vmatpush1.msra.mxu0 0.0
    %700 = vmatprep.subr.mxu0 0.0
    %701 = vmatpush1.msra.mxu0 0.0
    %702 = vmatprep.subr.mxu0 0.0
    %703 = vmatpush1.msra.mxu0 0.0
    %704 = vmatprep.subr.mxu0 0.0
    %705 = vmatpush1.msra.mxu0 0.0
    %706 = vmatprep.subr.mxu0 0.0
    %707 = vmatpush1.msra.mxu0 0.0
    %708 = vmatprep.subr.mxu0 0.0
    %709 = vmatpush1.msra.mxu0 0.0
    %710 = vmatprep.subr.mxu0 0.0
    %711 = vmatpush1.msra.mxu0 0.0
    %712 = vmatprep.subr.mxu0 0.0
    %713 = vmatpush1.msra.mxu0 0.0
    %714 = vmatprep.subr.mxu0 0.0
    %715 = vmatpush1.msra.mxu0 0.0
    %716 = vmatprep.subr.mxu0 0.0
    %717 = vmatpush1.msra.mxu0 0.0
    %718 = vmatprep.subr.mxu0 0.0
    %719 = vmatpush1.msra.mxu0 0.0
    %720 = vmatprep.mubr.f32.mxu0 0.0
    %721 = vmatmul.mubr.f32.gmra.mrb[0].mxu0 %v654
    %v722 = vpop.f32.mrb[0].mxu0
    %v723 = vadd.f32 0.0, %v722
    %v724 = vpop.f32.mrb[0].mxu0
    %v725 = vadd.f32 0.0, %v724
    %726 = vdwg.mxu0
    %v727 = vadd.f32 %v175, %v723
    %v728 = vadd.f32 %v177, %v725
    %v729 = vxor.u32 %v727, 2147483648
    %v730 = vxor.u32 %v728, 2147483648
    %v731 = vmul.f32 %v729, 1.442695
    %v732 = vpow.pop %v731
    %v733 = vmul.f32 %v730, 1.442695
    %v734 = vpow.pop %v733
    %v735 = vadd.f32 %v732, 1.0
    %v736 = vadd.f32 %v734, 1.0
    %v737 = vrcp.pop %v735
    %v738 = vmul.f32 1.0, %v737
    %v739 = vrcp.pop %v736
    %v740 = vmul.f32 1.0, %v739
    %v741 = vtanh.pop %v728
    %v742 = vmul.f32 %v738, %v648
    %v743 = vmul.f32 %v738, %v741
    %745 = vrot.lane.b32.xlu0 %v743, 64
    %v746 = vpop.permute.xlu0 %745
    %v748 = vadd.f32 %v742, %v746
    %v749 = vtanh.pop %v748
    %v750 = vmul.f32 %v740, %v749
    %752 = vrot.lane.b32.xlu0 %v750, 64
    %v753 = vpop.permute.xlu0 %752
    %v754 = vsel %vm248, %v753, 0
    %756 = vmatprep.subr.mxu0 %v198
    %757 = vmatpush1.msra.mxu0 %v197
    %758 = vmatprep.subr.mxu0 %v200
    %759 = vmatpush1.msra.mxu0 %v199
    %760 = vmatprep.subr.mxu0 %v202
    %761 = vmatpush1.msra.mxu0 %v201
    %762 = vmatprep.subr.mxu0 %v204
    %763 = vmatpush1.msra.mxu0 %v203
    %764 = vmatprep.subr.mxu0 %v206
    %765 = vmatpush1.msra.mxu0 %v205
    %766 = vmatprep.subr.mxu0 %v208
    %767 = vmatpush1.msra.mxu0 %v207
    %768 = vmatprep.subr.mxu0 %v210
    %769 = vmatpush1.msra.mxu0 %v209
    %770 = vmatprep.subr.mxu0 %v212
    %771 = vmatpush1.msra.mxu0 %v211
    %772 = vmatprep.subr.mxu0 0.0
    %773 = vmatpush1.msra.mxu0 0.0
    %774 = vmatprep.subr.mxu0 0.0
    %775 = vmatpush1.msra.mxu0 0.0
    %776 = vmatprep.subr.mxu0 0.0
    %777 = vmatpush1.msra.mxu0 0.0
    %778 = vmatprep.subr.mxu0 0.0
    %779 = vmatpush1.msra.mxu0 0.0
    %780 = vmatprep.subr.mxu0 0.0
    %781 = vmatpush1.msra.mxu0 0.0
    %782 = vmatprep.subr.mxu0 0.0
    %783 = vmatpush1.msra.mxu0 0.0
    %784 = vmatprep.subr.mxu0 0.0
    %785 = vmatpush1.msra.mxu0 0.0
    %786 = vmatprep.subr.mxu0 0.0
    %787 = vmatpush1.msra.mxu0 0.0
    %788 = vmatprep.subr.mxu0 0.0
    %789 = vmatpush1.msra.mxu0 0.0
    %790 = vmatprep.subr.mxu0 0.0
    %791 = vmatpush1.msra.mxu0 0.0
    %792 = vmatprep.subr.mxu0 0.0
    %793 = vmatpush1.msra.mxu0 0.0
    %794 = vmatprep.subr.mxu0 0.0
    %795 = vmatpush1.msra.mxu0 0.0
    %796 = vmatprep.subr.mxu0 0.0
    %797 = vmatpush1.msra.mxu0 0.0
    %798 = vmatprep.subr.mxu0 0.0
    %799 = vmatpush1.msra.mxu0 0.0
    %800 = vmatprep.subr.mxu0 0.0
    %801 = vmatpush1.msra.mxu0 0.0
    %802 = vmatprep.subr.mxu0 0.0
    %803 = vmatpush1.msra.mxu0 0.0
    %804 = vmatprep.subr.mxu0 0.0
    %805 = vmatpush1.msra.mxu0 0.0
    %806 = vmatprep.subr.mxu0 0.0
    %807 = vmatpush1.msra.mxu0 0.0
    %808 = vmatprep.subr.mxu0 0.0
    %809 = vmatpush1.msra.mxu0 0.0
    %810 = vmatprep.subr.mxu0 0.0
    %811 = vmatpush1.msra.mxu0 0.0
    %812 = vmatprep.subr.mxu0 0.0
    %813 = vmatpush1.msra.mxu0 0.0
    %814 = vmatprep.subr.mxu0 0.0
    %815 = vmatpush1.msra.mxu0 0.0
    %816 = vmatprep.subr.mxu0 0.0
    %817 = vmatpush1.msra.mxu0 0.0
    %818 = vmatprep.subr.mxu0 0.0
    %819 = vmatpush1.msra.mxu0 0.0
    %820 = vmatprep.mubr.f32.mxu0 0.0
    %821 = vmatmul.mubr.f32.gmra.mrb[0].mxu0 %v754
    %v822 = vpop.f32.mrb[0].mxu0
    %v823 = vadd.f32 0.0, %v822
    %v824 = vpop.f32.mrb[0].mxu0
    %v825 = vadd.f32 0.0, %v824
    %826 = vdwg.mxu0
    %v827 = vadd.f32 %v181, %v823
    %v828 = vadd.f32 %v183, %v825
    %v829 = vxor.u32 %v827, 2147483648
    %v830 = vxor.u32 %v828, 2147483648
    %v831 = vmul.f32 %v829, 1.442695
    %v832 = vpow.pop %v831
    %v833 = vmul.f32 %v830, 1.442695
    %v834 = vpow.pop %v833
    %v835 = vadd.f32 %v832, 1.0
    %v836 = vadd.f32 %v834, 1.0
    %v837 = vrcp.pop %v835
    %v838 = vmul.f32 1.0, %v837
    %v839 = vrcp.pop %v836
    %v840 = vmul.f32 1.0, %v839
    %v841 = vtanh.pop %v828
    %v842 = vmul.f32 %v838, %v748
    %v843 = vmul.f32 %v838, %v841
    %845 = vrot.lane.b32.xlu0 %v843, 64
    %v846 = vpop.permute.xlu0 %845
    %v848 = vadd.f32 %v842, %v846
    %v849 = vtanh.pop %v848
    %v850 = vmul.f32 %v840, %v849
    %852 = vrot.lane.b32.xlu0 %v850, 64
    %v853 = vpop.permute.xlu0 %852
    %v854 = vsel %vm248, %v853, 0
    %856 = vmatprep.subr.mxu0 %v198
    %857 = vmatpush1.msra.mxu0 %v197
    %858 = vmatprep.subr.mxu0 %v200
    %859 = vmatpush1.msra.mxu0 %v199
    %860 = vmatprep.subr.mxu0 %v202
    %861 = vmatpush1.msra.mxu0 %v201
    %862 = vmatprep.subr.mxu0 %v204
    %863 = vmatpush1.msra.mxu0 %v203
    %864 = vmatprep.subr.mxu0 %v206
    %865 = vmatpush1.msra.mxu0 %v205
    %866 = vmatprep.subr.mxu0 %v208
    %867 = vmatpush1.msra.mxu0 %v207
    %868 = vmatprep.subr.mxu0 %v210
    %869 = vmatpush1.msra.mxu0 %v209
    %870 = vmatprep.subr.mxu0 %v212
    %871 = vmatpush1.msra.mxu0 %v211
    %872 = vmatprep.subr.mxu0 0.0
    %873 = vmatpush1.msra.mxu0 0.0
    %874 = vmatprep.subr.mxu0 0.0
    %875 = vmatpush1.msra.mxu0 0.0
    %876 = vmatprep.subr.mxu0 0.0
    %877 = vmatpush1.msra.mxu0 0.0
    %878 = vmatprep.subr.mxu0 0.0
    %879 = vmatpush1.msra.mxu0 0.0
    %880 = vmatprep.subr.mxu0 0.0
    %881 = vmatpush1.msra.mxu0 0.0
    %882 = vmatprep.subr.mxu0 0.0
    %883 = vmatpush1.msra.mxu0 0.0
    %884 = vmatprep.subr.mxu0 0.0
    %885 = vmatpush1.msra.mxu0 0.0
    %886 = vmatprep.subr.mxu0 0.0
    %887 = vmatpush1.msra.mxu0 0.0
    %888 = vmatprep.subr.mxu0 0.0
    %889 = vmatpush1.msra.mxu0 0.0
    %890 = vmatprep.subr.mxu0 0.0
    %891 = vmatpush1.msra.mxu0 0.0
    %892 = vmatprep.subr.mxu0 0.0
    %893 = vmatpush1.msra.mxu0 0.0
    %894 = vmatprep.subr.mxu0 0.0
    %895 = vmatpush1.msra.mxu0 0.0
    %896 = vmatprep.subr.mxu0 0.0
    %897 = vmatpush1.msra.mxu0 0.0
    %898 = vmatprep.subr.mxu0 0.0
    %899 = vmatpush1.msra.mxu0 0.0
    %900 = vmatprep.subr.mxu0 0.0
    %901 = vmatpush1.msra.mxu0 0.0
    %902 = vmatprep.subr.mxu0 0.0
    %903 = vmatpush1.msra.mxu0 0.0
    %904 = vmatprep.subr.mxu0 0.0
    %905 = vmatpush1.msra.mxu0 0.0
    %906 = vmatprep.subr.mxu0 0.0
    %907 = vmatpush1.msra.mxu0 0.0
    %908 = vmatprep.subr.mxu0 0.0
    %909 = vmatpush1.msra.mxu0 0.0
    %910 = vmatprep.subr.mxu0 0.0
    %911 = vmatpush1.msra.mxu0 0.0
    %912 = vmatprep.subr.mxu0 0.0
    %913 = vmatpush1.msra.mxu0 0.0
    %914 = vmatprep.subr.mxu0 0.0
    %915 = vmatpush1.msra.mxu0 0.0
    %916 = vmatprep.subr.mxu0 0.0
    %917 = vmatpush1.msra.mxu0 0.0
    %918 = vmatprep.subr.mxu0 0.0
    %919 = vmatpush1.msra.mxu0 0.0
    %920 = vmatprep.mubr.f32.mxu0 0.0
    %921 = vmatmul.mubr.f32.gmra.mrb[0].mxu0 %v854
    %v922 = vpop.f32.mrb[0].mxu0
    %v923 = vadd.f32 0.0, %v922
    %v924 = vpop.f32.mrb[0].mxu0
    %v925 = vadd.f32 0.0, %v924
    %926 = vdwg.mxu0
    %v927 = vadd.f32 %v187, %v923
    %v928 = vadd.f32 %v189, %v925
    %v929 = vxor.u32 %v927, 2147483648
    %v930 = vxor.u32 %v928, 2147483648
    %v931 = vmul.f32 %v929, 1.442695
    %v932 = vpow.pop %v931
    %v933 = vmul.f32 %v930, 1.442695
    %v934 = vpow.pop %v933
    %v935 = vadd.f32 %v932, 1.0
    %v936 = vadd.f32 %v934, 1.0
    %v937 = vrcp.pop %v935
    %v938 = vmul.f32 1.0, %v937
    %v939 = vrcp.pop %v936
    %v940 = vmul.f32 1.0, %v939
    %v941 = vtanh.pop %v928
    %v942 = vmul.f32 %v938, %v848
    %v943 = vmul.f32 %v938, %v941
    %945 = vrot.lane.b32.xlu0 %v943, 64
    %v946 = vpop.permute.xlu0 %945
    %v948 = vadd.f32 %v942, %v946
    %v949 = vtanh.pop %v948
    %v950 = vmul.f32 %v940, %v949
    %952 = vrot.lane.b32.xlu0 %v950, 64
    %v953 = vpop.permute.xlu0 %952
    %v954 = vsel %vm248, %v953, 0
    %956 = vmatprep.subr.mxu0 %v198
    %957 = vmatpush1.msra.mxu0 %v197
    %958 = vmatprep.subr.mxu0 %v200
    %959 = vmatpush1.msra.mxu0 %v199
    %960 = vmatprep.subr.mxu0 %v202
    %961 = vmatpush1.msra.mxu0 %v201
    %962 = vmatprep.subr.mxu0 %v204
    %963 = vmatpush1.msra.mxu0 %v203
    %964 = vmatprep.subr.mxu0 %v206
    %965 = vmatpush1.msra.mxu0 %v205
    %966 = vmatprep.subr.mxu0 %v208
    %967 = vmatpush1.msra.mxu0 %v207
    %968 = vmatprep.subr.mxu0 %v210
    %969 = vmatpush1.msra.mxu0 %v209
    %970 = vmatprep.subr.mxu0 %v212
    %971 = vmatpush1.msra.mxu0 %v211
    %972 = vmatprep.subr.mxu0 0.0
    %973 = vmatpush1.msra.mxu0 0.0
    %974 = vmatprep.subr.mxu0 0.0
    %975 = vmatpush1.msra.mxu0 0.0
    %976 = vmatprep.subr.mxu0 0.0
    %977 = vmatpush1.msra.mxu0 0.0
    %978 = vmatprep.subr.mxu0 0.0
    %979 = vmatpush1.msra.mxu0 0.0
    %980 = vmatprep.subr.mxu0 0.0
    %981 = vmatpush1.msra.mxu0 0.0
    %982 = vmatprep.subr.mxu0 0.0
    %983 = vmatpush1.msra.mxu0 0.0
    %984 = vmatprep.subr.mxu0 0.0
    %985 = vmatpush1.msra.mxu0 0.0
    %986 = vmatprep.subr.mxu0 0.0
    %987 = vmatpush1.msra.mxu0 0.0
    %988 = vmatprep.subr.mxu0 0.0
    %989 = vmatpush1.msra.mxu0 0.0
    %990 = vmatprep.subr.mxu0 0.0
    %991 = vmatpush1.msra.mxu0 0.0
    %992 = vmatprep.subr.mxu0 0.0
    %993 = vmatpush1.msra.mxu0 0.0
    %994 = vmatprep.subr.mxu0 0.0
    %995 = vmatpush1.msra.mxu0 0.0
    %996 = vmatprep.subr.mxu0 0.0
    %997 = vmatpush1.msra.mxu0 0.0
    %998 = vmatprep.subr.mxu0 0.0
    %999 = vmatpush1.msra.mxu0 0.0
    %1000 = vmatprep.subr.mxu0 0.0
    %1001 = vmatpush1.msra.mxu0 0.0
    %1002 = vmatprep.subr.mxu0 0.0
    %1003 = vmatpush1.msra.mxu0 0.0
    %1004 = vmatprep.subr.mxu0 0.0
    %1005 = vmatpush1.msra.mxu0 0.0
    %1006 = vmatprep.subr.mxu0 0.0
    %1007 = vmatpush1.msra.mxu0 0.0
    %1008 = vmatprep.subr.mxu0 0.0
    %1009 = vmatpush1.msra.mxu0 0.0
    %1010 = vmatprep.subr.mxu0 0.0
    %1011 = vmatpush1.msra.mxu0 0.0
    %1012 = vmatprep.subr.mxu0 0.0
    %1013 = vmatpush1.msra.mxu0 0.0
    %1014 = vmatprep.subr.mxu0 0.0
    %1015 = vmatpush1.msra.mxu0 0.0
    %1016 = vmatprep.subr.mxu0 0.0
    %1017 = vmatpush1.msra.mxu0 0.0
    %1018 = vmatprep.subr.mxu0 0.0
    %1019 = vmatpush1.msra.mxu0 0.0
    %1020 = vmatprep.mubr.f32.mxu0 0.0
    %1021 = vmatmul.mubr.f32.gmra.mrb[0].mxu0 %v954
    %v1022 = vpop.f32.mrb[0].mxu0
    %v1023 = vadd.f32 0.0, %v1022
    %v1024 = vpop.f32.mrb[0].mxu0
    %v1025 = vadd.f32 0.0, %v1024
    %1026 = vdwg.mxu0
    %v1027 = vadd.f32 %v193, %v1023
    %v1028 = vadd.f32 %v195, %v1025
    %v1029 = vxor.u32 %v1027, 2147483648
    %v1030 = vxor.u32 %v1028, 2147483648
    %v1031 = vmul.f32 %v1029, 1.442695
    %v1032 = vpow.pop %v1031
    %v1033 = vmul.f32 %v1030, 1.442695
    %v1034 = vpow.pop %v1033
    %v1035 = vadd.f32 %v1032, 1.0
    %v1036 = vadd.f32 %v1034, 1.0
    %v1037 = vrcp.pop %v1035
    %v1038 = vmul.f32 1.0, %v1037
    %v1039 = vrcp.pop %v1036
    %v1040 = vmul.f32 1.0, %v1039
    %v1041 = vtanh.pop %v1028
    %v1042 = vmul.f32 %v1038, %v948
    %v1043 = vmul.f32 %v1038, %v1041
    %1045 = vrot.lane.b32.xlu0 %v1043, 64
    %v1046 = vpop.permute.xlu0 %1045
    %v1048 = vadd.f32 %v1042, %v1046
    %v1049 = vtanh.pop %v1048
    %v1050 = vmul.f32 %v1040, %v1049
    %v1051 = vld [vmem:[%s4] sm:$0xff]
    %v1052 = vld [vmem:[%s4 + $0x8] sm:$0xff]
    %v1053 = vld [vmem:[%s4 + $0x10] sm:$0xff]
    %v1054 = vld [vmem:[%s4 + $0x18] sm:$0xff]
    %v1055 = vld [vmem:[%s4 + $0x20] sm:$0xff]
    %v1056 = vld [vmem:[%s4 + $0x28] sm:$0xff]
    %v1057 = vld [vmem:[%s4 + $0x30] sm:$0xff]
    %v1058 = vld [vmem:[%s4 + $0x38] sm:$0xff]
    %v1060 = vrot.slane %v1050, 2
    %1061 = vrot.lane.b32.xlu0 %v1060, 32
    %v1062 = vpop.permute.xlu0 %1061
    %vm1063 = vcmask 261120
    %v1064 = vsel %vm1063, %v1062, 0
    %1066 = vmatprep.subr.mxu0 0.0
    %1067 = vmatpush1.msra.mxu0 %v1055
    %1068 = vmatprep.subr.mxu0 0.0
    %1069 = vmatpush1.msra.mxu0 %v1056
    %1070 = vmatprep.subr.mxu0 0.0
    %1071 = vmatpush1.msra.mxu0 %v1057
    %1072 = vmatprep.subr.mxu0 0.0
    %1073 = vmatpush1.msra.mxu0 %v1058
    %1074 = vmatprep.subr.mxu0 0.0
    %1075 = vmatpush1.msra.mxu0 0.0
    %1076 = vmatprep.subr.mxu0 0.0
    %1077 = vmatpush1.msra.mxu0 0.0
    %1078 = vmatprep.subr.mxu0 0.0
    %1079 = vmatpush1.msra.mxu0 0.0
    %1080 = vmatprep.subr.mxu0 0.0
    %1081 = vmatpush1.msra.mxu0 0.0
    %1082 = vmatprep.subr.mxu0 0.0
    %1083 = vmatpush1.msra.mxu0 0.0
    %1084 = vmatprep.subr.mxu0 0.0
    %1085 = vmatpush1.msra.mxu0 0.0
    %1086 = vmatprep.subr.mxu0 0.0
    %1087 = vmatpush1.msra.mxu0 0.0
    %1088 = vmatprep.subr.mxu0 0.0
    %1089 = vmatpush1.msra.mxu0 0.0
    %1090 = vmatprep.subr.mxu0 0.0
    %1091 = vmatpush1.msra.mxu0 0.0
    %1092 = vmatprep.subr.mxu0 0.0
    %1093 = vmatpush1.msra.mxu0 0.0
    %1094 = vmatprep.subr.mxu0 0.0
    %1095 = vmatpush1.msra.mxu0 0.0
    %1096 = vmatprep.subr.mxu0 0.0
    %1097 = vmatpush1.msra.mxu0 0.0
    %1098 = vmatprep.subr.mxu0 0.0
    %1099 = vmatpush1.msra.mxu0 0.0
    %1100 = vmatprep.subr.mxu0 0.0
    %1101 = vmatpush1.msra.mxu0 0.0
    %1102 = vmatprep.subr.mxu0 0.0
    %1103 = vmatpush1.msra.mxu0 0.0
    %1104 = vmatprep.subr.mxu0 0.0
    %1105 = vmatpush1.msra.mxu0 0.0
    %1106 = vmatprep.subr.mxu0 0.0
    %1107 = vmatpush1.msra.mxu0 0.0
    %1108 = vmatprep.subr.mxu0 0.0
    %1109 = vmatpush1.msra.mxu0 0.0
    %1110 = vmatprep.subr.mxu0 0.0
    %1111 = vmatpush1.msra.mxu0 0.0
    %1112 = vmatprep.subr.mxu0 0.0
    %1113 = vmatpush1.msra.mxu0 0.0
    %1114 = vmatprep.subr.mxu0 0.0
    %1115 = vmatpush1.msra.mxu0 0.0
    %1116 = vmatprep.subr.mxu0 0.0
    %1117 = vmatpush1.msra.mxu0 0.0
    %1118 = vmatprep.subr.mxu0 0.0
    %1119 = vmatpush1.msra.mxu0 0.0
    %1120 = vmatprep.subr.mxu0 0.0
    %1121 = vmatpush1.msra.mxu0 0.0
    %1122 = vmatprep.subr.mxu0 0.0
    %1123 = vmatpush1.msra.mxu0 0.0
    %1124 = vmatprep.subr.mxu0 0.0
    %1125 = vmatpush1.msra.mxu0 0.0
    %1126 = vmatprep.subr.mxu0 0.0
    %1127 = vmatpush1.msra.mxu0 0.0
    %1128 = vmatprep.subr.mxu0 0.0
    %1129 = vmatpush1.msra.mxu0 0.0
    %1130 = vmatprep.mubr.f32.mxu0 0.0
    %1131 = vmatmul.mubr.f32.gmra.mrb[0].mxu0 %v1064
    %v1132 = vpop.f32.mrb[0].mxu0
    %v1133 = vadd.f32 0.0, %v1132
    %v1134 = vpop.f32.mrb[0].mxu0
    %1135 = vdwg.mxu0
    %v1136 = vld [vmem:[%s4 + $0x40] sm:$0xff]
    %v1137 = vld [vmem:[%s4 + $0x48] sm:$0xff]
    %v1138 = vld [vmem:[%s4 + $0x50] sm:$0xff]
    %v1139 = vld [vmem:[%s4 + $0x58] sm:$0xff]
    %v1140 = vld [vmem:[%s4 + $0x60] sm:$0xff]
    %v1141 = vld [vmem:[%s4 + $0x68] sm:$0xff]
    %v1142 = vld [vmem:[%s4 + $0x70] sm:$0xff]
    %v1143 = vld [vmem:[%s4 + $0x78] sm:$0xff]
    %v1144 = vrot.slane %v1050, 6
    %1145 = vrot.lane.b32.xlu0 %v1144, 32
    %v1146 = vpop.permute.xlu0 %1145
    %v1147 = vsel %vm1063, %v1146, 0
    %1149 = vmatprep.subr.mxu0 0.0
    %1150 = vmatpush1.msra.mxu0 %v1140
    %1151 = vmatprep.subr.mxu0 0.0
    %1152 = vmatpush1.msra.mxu0 %v1141
    %1153 = vmatprep.subr.mxu0 0.0
    %1154 = vmatpush1.msra.mxu0 %v1142
    %1155 = vmatprep.subr.mxu0 0.0
    %1156 = vmatpush1.msra.mxu0 %v1143
    %1157 = vmatprep.subr.mxu0 0.0
    %1158 = vmatpush1.msra.mxu0 0.0
    %1159 = vmatprep.subr.mxu0 0.0
    %1160 = vmatpush1.msra.mxu0 0.0
    %1161 = vmatprep.subr.mxu0 0.0
    %1162 = vmatpush1.msra.mxu0 0.0
    %1163 = vmatprep.subr.mxu0 0.0
    %1164 = vmatpush1.msra.mxu0 0.0
    %1165 = vmatprep.subr.mxu0 0.0
    %1166 = vmatpush1.msra.mxu0 0.0
    %1167 = vmatprep.subr.mxu0 0.0
    %1168 = vmatpush1.msra.mxu0 0.0
    %1169 = vmatprep.subr.mxu0 0.0
    %1170 = vmatpush1.msra.mxu0 0.0
    %1171 = vmatprep.subr.mxu0 0.0
    %1172 = vmatpush1.msra.mxu0 0.0
    %1173 = vmatprep.subr.mxu0 0.0
    %1174 = vmatpush1.msra.mxu0 0.0
    %1175 = vmatprep.subr.mxu0 0.0
    %1176 = vmatpush1.msra.mxu0 0.0
    %1177 = vmatprep.subr.mxu0 0.0
    %1178 = vmatpush1.msra.mxu0 0.0
    %1179 = vmatprep.subr.mxu0 0.0
    %1180 = vmatpush1.msra.mxu0 0.0
    %1181 = vmatprep.subr.mxu0 0.0
    %1182 = vmatpush1.msra.mxu0 0.0
    %1183 = vmatprep.subr.mxu0 0.0
    %1184 = vmatpush1.msra.mxu0 0.0
    %1185 = vmatprep.subr.mxu0 0.0
    %1186 = vmatpush1.msra.mxu0 0.0
    %1187 = vmatprep.subr.mxu0 0.0
    %1188 = vmatpush1.msra.mxu0 0.0
    %1189 = vmatprep.subr.mxu0 0.0
    %1190 = vmatpush1.msra.mxu0 0.0
    %1191 = vmatprep.subr.mxu0 0.0
    %1192 = vmatpush1.msra.mxu0 0.0
    %1193 = vmatprep.subr.mxu0 0.0
    %1194 = vmatpush1.msra.mxu0 0.0
    %1195 = vmatprep.subr.mxu0 0.0
    %1196 = vmatpush1.msra.mxu0 0.0
    %1197 = vmatprep.subr.mxu0 0.0
    %1198 = vmatpush1.msra.mxu0 0.0
    %1199 = vmatprep.subr.mxu0 0.0
    %1200 = vmatpush1.msra.mxu0 0.0
    %1201 = vmatprep.subr.mxu0 0.0
    %1202 = vmatpush1.msra.mxu0 0.0
    %1203 = vmatprep.subr.mxu0 0.0
    %1204 = vmatpush1.msra.mxu0 0.0
    %1205 = vmatprep.subr.mxu0 0.0
    %1206 = vmatpush1.msra.mxu0 0.0
    %1207 = vmatprep.subr.mxu0 0.0
    %1208 = vmatpush1.msra.mxu0 0.0
    %1209 = vmatprep.subr.mxu0 0.0
    %1210 = vmatpush1.msra.mxu0 0.0
    %1211 = vmatprep.subr.mxu0 0.0
    %1212 = vmatpush1.msra.mxu0 0.0
    %1213 = vmatprep.mubr.f32.mxu0 0.0
    %1214 = vmatmul.mubr.f32.gmra.mrb[0].mxu0 %v1147
    %v1215 = vpop.f32.mrb[0].mxu0
    %v1216 = vadd.f32 0.0, %v1215
    %v1217 = vpop.f32.mrb[0].mxu0
    %1218 = vdwg.mxu0
    %1219 = vrot.lane.b32.xlu0 %v1050, 32
    %v1220 = vpop.permute.xlu0 %1219
    %v1221 = vsel %vm1063, %v1220, 0
    %1223 = vmatprep.subr.mxu0 0.0
    %1224 = vmatpush1.msra.mxu0 %v1051
    %1225 = vmatprep.subr.mxu0 0.0
    %1226 = vmatpush1.msra.mxu0 %v1052
    %1227 = vmatprep.subr.mxu0 0.0
    %1228 = vmatpush1.msra.mxu0 %v1053
    %1229 = vmatprep.subr.mxu0 0.0
    %1230 = vmatpush1.msra.mxu0 %v1054
    %1231 = vmatprep.subr.mxu0 0.0
    %1232 = vmatpush1.msra.mxu0 0.0
    %1233 = vmatprep.subr.mxu0 0.0
    %1234 = vmatpush1.msra.mxu0 0.0
    %1235 = vmatprep.subr.mxu0 0.0
    %1236 = vmatpush1.msra.mxu0 0.0
    %1237 = vmatprep.subr.mxu0 0.0
    %1238 = vmatpush1.msra.mxu0 0.0
    %1239 = vmatprep.subr.mxu0 0.0
    %1240 = vmatpush1.msra.mxu0 0.0
    %1241 = vmatprep.subr.mxu0 0.0
    %1242 = vmatpush1.msra.mxu0 0.0
    %1243 = vmatprep.subr.mxu0 0.0
    %1244 = vmatpush1.msra.mxu0 0.0
    %1245 = vmatprep.subr.mxu0 0.0
    %1246 = vmatpush1.msra.mxu0 0.0
    %1247 = vmatprep.subr.mxu0 0.0
    %1248 = vmatpush1.msra.mxu0 0.0
    %1249 = vmatprep.subr.mxu0 0.0
    %1250 = vmatpush1.msra.mxu0 0.0
    %1251 = vmatprep.subr.mxu0 0.0
    %1252 = vmatpush1.msra.mxu0 0.0
    %1253 = vmatprep.subr.mxu0 0.0
    %1254 = vmatpush1.msra.mxu0 0.0
    %1255 = vmatprep.subr.mxu0 0.0
    %1256 = vmatpush1.msra.mxu0 0.0
    %1257 = vmatprep.subr.mxu0 0.0
    %1258 = vmatpush1.msra.mxu0 0.0
    %1259 = vmatprep.subr.mxu0 0.0
    %1260 = vmatpush1.msra.mxu0 0.0
    %1261 = vmatprep.subr.mxu0 0.0
    %1262 = vmatpush1.msra.mxu0 0.0
    %1263 = vmatprep.subr.mxu0 0.0
    %1264 = vmatpush1.msra.mxu0 0.0
    %1265 = vmatprep.subr.mxu0 0.0
    %1266 = vmatpush1.msra.mxu0 0.0
    %1267 = vmatprep.subr.mxu0 0.0
    %1268 = vmatpush1.msra.mxu0 0.0
    %1269 = vmatprep.subr.mxu0 0.0
    %1270 = vmatpush1.msra.mxu0 0.0
    %1271 = vmatprep.subr.mxu0 0.0
    %1272 = vmatpush1.msra.mxu0 0.0
    %1273 = vmatprep.subr.mxu0 0.0
    %1274 = vmatpush1.msra.mxu0 0.0
    %1275 = vmatprep.subr.mxu0 0.0
    %1276 = vmatpush1.msra.mxu0 0.0
    %1277 = vmatprep.subr.mxu0 0.0
    %1278 = vmatpush1.msra.mxu0 0.0
    %1279 = vmatprep.subr.mxu0 0.0
    %1280 = vmatpush1.msra.mxu0 0.0
    %1281 = vmatprep.subr.mxu0 0.0
    %1282 = vmatpush1.msra.mxu0 0.0
    %1283 = vmatprep.subr.mxu0 0.0
    %1284 = vmatpush1.msra.mxu0 0.0
    %1285 = vmatprep.subr.mxu0 0.0
    %1286 = vmatpush1.msra.mxu0 0.0
    %1287 = vmatprep.mubr.f32.mxu0 0.0
    %1288 = vmatmul.mubr.f32.gmra.mrb[0].mxu0 %v1221
    %v1289 = vpop.f32.mrb[0].mxu0
    %v1290 = vadd.f32 %v1133, %v1289
    %v1291 = vpop.f32.mrb[0].mxu0
    %1292 = vdwg.mxu0
    %v1293 = vrot.slane %v1050, 4
    %1294 = vrot.lane.b32.xlu0 %v1293, 32
    %v1295 = vpop.permute.xlu0 %1294
    %v1296 = vsel %vm1063, %v1295, 0
    %1298 = vmatprep.subr.mxu0 0.0
    %1299 = vmatpush1.msra.mxu0 %v1136
    %1300 = vmatprep.subr.mxu0 0.0
    %1301 = vmatpush1.msra.mxu0 %v1137
    %1302 = vmatprep.subr.mxu0 0.0
    %1303 = vmatpush1.msra.mxu0 %v1138
    %1304 = vmatprep.subr.mxu0 0.0
    %1305 = vmatpush1.msra.mxu0 %v1139
    %1306 = vmatprep.subr.mxu0 0.0
    %1307 = vmatpush1.msra.mxu0 0.0
    %1308 = vmatprep.subr.mxu0 0.0
    %1309 = vmatpush1.msra.mxu0 0.0
    %1310 = vmatprep.subr.mxu0 0.0
    %1311 = vmatpush1.msra.mxu0 0.0
    %1312 = vmatprep.subr.mxu0 0.0
    %1313 = vmatpush1.msra.mxu0 0.0
    %1314 = vmatprep.subr.mxu0 0.0
    %1315 = vmatpush1.msra.mxu0 0.0
    %1316 = vmatprep.subr.mxu0 0.0
    %1317 = vmatpush1.msra.mxu0 0.0
    %1318 = vmatprep.subr.mxu0 0.0
    %1319 = vmatpush1.msra.mxu0 0.0
    %1320 = vmatprep.subr.mxu0 0.0
    %1321 = vmatpush1.msra.mxu0 0.0
    %1322 = vmatprep.subr.mxu0 0.0
    %1323 = vmatpush1.msra.mxu0 0.0
    %1324 = vmatprep.subr.mxu0 0.0
    %1325 = vmatpush1.msra.mxu0 0.0
    %1326 = vmatprep.subr.mxu0 0.0
    %1327 = vmatpush1.msra.mxu0 0.0
    %1328 = vmatprep.subr.mxu0 0.0
    %1329 = vmatpush1.msra.mxu0 0.0
    %1330 = vmatprep.subr.mxu0 0.0
    %1331 = vmatpush1.msra.mxu0 0.0
    %1332 = vmatprep.subr.mxu0 0.0
    %1333 = vmatpush1.msra.mxu0 0.0
    %1334 = vmatprep.subr.mxu0 0.0
    %1335 = vmatpush1.msra.mxu0 0.0
    %1336 = vmatprep.subr.mxu0 0.0
    %1337 = vmatpush1.msra.mxu0 0.0
    %1338 = vmatprep.subr.mxu0 0.0
    %1339 = vmatpush1.msra.mxu0 0.0
    %1340 = vmatprep.subr.mxu0 0.0
    %1341 = vmatpush1.msra.mxu0 0.0
    %1342 = vmatprep.subr.mxu0 0.0
    %1343 = vmatpush1.msra.mxu0 0.0
    %1344 = vmatprep.subr.mxu0 0.0
    %1345 = vmatpush1.msra.mxu0 0.0
    %1346 = vmatprep.subr.mxu0 0.0
    %1347 = vmatpush1.msra.mxu0 0.0
    %1348 = vmatprep.subr.mxu0 0.0
    %1349 = vmatpush1.msra.mxu0 0.0
    %1350 = vmatprep.subr.mxu0 0.0
    %1351 = vmatpush1.msra.mxu0 0.0
    %1352 = vmatprep.subr.mxu0 0.0
    %1353 = vmatpush1.msra.mxu0 0.0
    %1354 = vmatprep.subr.mxu0 0.0
    %1355 = vmatpush1.msra.mxu0 0.0
    %1356 = vmatprep.subr.mxu0 0.0
    %1357 = vmatpush1.msra.mxu0 0.0
    %1358 = vmatprep.subr.mxu0 0.0
    %1359 = vmatpush1.msra.mxu0 0.0
    %1360 = vmatprep.subr.mxu0 0.0
    %1361 = vmatpush1.msra.mxu0 0.0
    %1362 = vmatprep.mubr.f32.mxu0 0.0
    %1363 = vmatmul.mubr.f32.gmra.mrb[0].mxu0 %v1296
    %v1364 = vpop.f32.mrb[0].mxu0
    %v1365 = vadd.f32 %v1216, %v1364
    %v1366 = vpop.f32.mrb[0].mxu0
    %1367 = vdwg.mxu0
    %v1368 = vadd.f32 %v1290, %v1365
    %v1369 = vld [vmem:[%s5] sm:$0x1]
    %v1371 = vlaneseq
    %v1372 = vshrl.u32 %v1371, 7
    %v1373 = vsub.s32 0, %v1372
    %v1374 = vrot.slane %v1369, %v1373
    %v1376 = vadd.f32 %v1368, %v1374
    %vm1377 = vcmask 25600
    %v1378 = vsel %vm1377, %v1376, -inf
    %1379 = vmax.xlane.f32.xlu0 %v1378
    %v1380 = vpop.xlane.xlu0 %1379
    %v1381 = vsub.f32 %v1376, %v1380
    %v1382 = vmul.f32 %v1381, 1.442695
    %v1383 = vpow.pop %v1382
    %v1384 = vsel %vm1377, %v1383, 0.0
    %1385 = vadd.xlane.f32.xlu0 %v1384
    %v1386 = vpop.xlane.xlu0 %1385
    %v1387 = vrcp.pop %v1386
    %v1388 = vmul.f32 %v1383, %v1387
    %v1389 = vld [vmem:[%s6] sm:$0x3]
    %v1390 = vmul.f32 %v1388, %v1389
    %v1391 = vsel %vm1377, %v1390, 0.0
    %1392 = vadd.xlane.f32.xlu0 %v1391
    %v1393 = vpop.xlane.xlu0 %1392
    %v1394 = vadd.f32 %v1393, 1e-08
    %v1395 = vrcp.pop %v1394
    %v1396 = vmul.f32 %v1390, %v1395
    %1397 = vst.msk [vmem:[#allocation2] sm:$0x3] %vm1377, %v1396
    // Predicated region
    $region30: #{portfolio_lstm_forward.1} parent=1 // pred_check
      _
    $region31: #{portfolio_lstm_forward.1} parent=1 // pred_check_branch
      %1399 = sbr.rel (0) target = $region33
    $region32: #{portfolio_lstm_forward.1} parent=1 // pred_region
      %s1401 = ssub.s32 32, 32
      %1402 = vsyncadd [#allocation3], %s1401
      %s1404 = sshll.u32 [#allocation2], 4
      %s1405 = int_to_ptr.vmem [resolvable:$true] %s1404
      %1407 = dma.vmem_to_hbm [thread:$0]  %s1405, 32, %s7, [#allocation3]
    $region33: #{portfolio_lstm_forward.1} parent=1 // pred_fallthru
      _
    // Predicated region
    $region34: #{portfolio_lstm_forward.1} parent=1 // pred_check
      _
    $region35: #{portfolio_lstm_forward.1} parent=1 // pred_check_branch
      %1409 = sbr.rel (0) target = $region37
    $region36: #{portfolio_lstm_forward.1} parent=1 // pred_region
      %1410 = dma.done [#allocation3], 32
    $region37: #{portfolio_lstm_forward.1} parent=1 // pred_fallthru
      _
    %1411 = vsyncpa [#allocation3], 1

</llo_original>
